<compile_context>
chip_gen: v7x
topology: tpu7x:2x2x1
jax: 0.10.0
libtpu: 0.0.40
codegen_flags: <defaults>
</compile_context>

<pallas_src>
import functools

import jax
import jax.numpy as jnp
from jax.experimental import pallas as pl
from jax.experimental.pallas import tpu as pltpu  # noqa: F401  (kept for clarity)


# ----------------------------- hyper params ---------------------------------
ACTION_DIM = 4
STATE_DIM = 8
HIDDEN_DIM = 32
LATENT_DIM = 64
MIN_STD_DEV = 0.1

B = 2   # batch
T = 8   # sequence length


# ------------------------------- kernel -------------------------------------
def rssm_kernel(
    # inputs (batch-major flattened sequences + params)
    x_ref, obs_ref, mask_ref, h0_ref,
    w_lsa_ref, b_lsa_ref,
    w_ih_ref, b_ih_ref, w_hh_ref, b_hh_ref,
    w_prior_ref, b_prior_ref, w_pout_ref, b_pout_ref,
    w_post_ref, b_post_ref, w_qout_ref, b_qout_ref,
    # outputs
    h_seq_ref, next_h_ref, dist_ref,
    *, num_steps, batch, hidden, state, min_std,
):
    Tn, Bn, H, S = num_steps, batch, hidden, state

    # ---- hoisted: encoder + GRU input projection for all timesteps at once ----
    x = x_ref[...]                                            # [B*T, Din]
    enc = jnp.maximum(
        jnp.dot(x, w_lsa_ref[...], preferred_element_type=jnp.float32)
        + b_lsa_ref[...], 0.0)                                # [B*T, H]
    gi_all = (jnp.dot(enc, w_ih_ref[...], preferred_element_type=jnp.float32)
              + b_ih_ref[...]).reshape(Bn, Tn, 3 * H)         # [B, T, 3H]

    mask = mask_ref[...]                                      # [B, T]
    w_hh = w_hh_ref[...]
    b_hh = b_hh_ref[...]

    # ---- serial GRU recurrence, fully unrolled (static indices) ----
    h = h0_ref[...]                                           # [B, H]
    h_outs = []
    for t in range(Tn):
        gi = gi_all[:, t, :]                                  # [B, 3H]
        gh = jnp.dot(h, w_hh, preferred_element_type=jnp.float32) + b_hh
        r = jax.nn.sigmoid(gi[:, 0:H] + gh[:, 0:H])
        z = jax.nn.sigmoid(gi[:, H:2 * H] + gh[:, H:2 * H])
        n = jnp.tanh(gi[:, 2 * H:3 * H] + r * gh[:, 2 * H:3 * H])
        h_cand = (1.0 - z) * n + z * h
        m = mask[:, t:t + 1]                                  # [B, 1]
        h = m * h_cand + (1.0 - m) * h                        # keep h on padded steps
        h_outs.append(m * h_cand)                             # padded outputs -> 0

    next_h_ref[...] = h                                       # single final store

    # batch-major [B*T, H] slab of GRU outputs
    h_flat = jnp.stack(h_outs, axis=1).reshape(Bn * Tn, H)
    h_seq_ref[...] = h_flat

    # ---- prior head (mean|std weights fused -> one [H, 2S] dot) ----
    hp = jnp.maximum(
        jnp.dot(h_flat, w_prior_ref[...], preferred_element_type=jnp.float32)
        + b_prior_ref[...], 0.0)
    pout = (jnp.dot(hp, w_pout_ref[...], preferred_element_type=jnp.float32)
            + b_pout_ref[...])                                # [B*T, 2S]

    # ---- posterior head (concat(h, obs) @ fused [H+L, H] weight) ----
    hq_in = jnp.concatenate([h_flat, obs_ref[...]], axis=1)   # [B*T, H+L]
    hq = jnp.maximum(
        jnp.dot(hq_in, w_post_ref[...], preferred_element_type=jnp.float32)
        + b_post_ref[...], 0.0)
    qout = (jnp.dot(hq, w_qout_ref[...], preferred_element_type=jnp.float32)
            + b_qout_ref[...])                                # [B*T, 2S]

    # ---- lane-packed distribution output: [pm | ps | qm | qs] ----
    raw = jnp.concatenate([pout, qout], axis=1)               # [B*T, 4S]
    col = jax.lax.broadcasted_iota(jnp.int32, (Bn * Tn, 4 * S), 1)
    is_std = jnp.logical_or(
        jnp.logical_and(col >= S, col < 2 * S), col >= 3 * S)
    dist_ref[...] = jnp.where(is_std, jax.nn.softplus(raw) + min_std, raw)


# ------------------------------- wrapper -------------------------------------
@jax.jit
def rssm_forward(params, prev_state, prev_action, action_lengths,
                 recurrent_hidden_state, latent_observation):
    """Returns ((prior_mean, prior_std), (post_mean, post_std),
                recurrent_hidden_states [B,T,H], next_recurrent_hidden_state [1,B,H])."""
    b, t_len, _ = prev_action.shape
    if prev_state is None:
        prev_state = jnp.zeros((b, t_len, STATE_DIM), prev_action.dtype)
    x = jnp.concatenate([prev_state, prev_action], axis=2)        # [B,T,S+A]
    if recurrent_hidden_state is None:
        h0 = jnp.zeros((b, HIDDEN_DIM), jnp.float32)
    else:
        h0 = recurrent_hidden_state[0]                            # [B,H]

    # length mask (implements pack_padded/pad_packed semantics)
    mask = (jnp.arange(t_len)[None, :] < action_lengths[:, None]).astype(jnp.float32)

    din = x.shape[-1]
    x_flat = x.reshape(b * t_len, din)                            # batch-major flatten (free)
    obs_flat = latent_observation.reshape(b * t_len, LATENT_DIM)

    # fused weight packing (mean|std per head, posterior h|obs rows)
    w_pout = jnp.concatenate([params["w_mp"], params["w_sp"]], axis=1)    # [H, 2S]
    b_pout = jnp.concatenate([params["b_mp"], params["b_sp"]], axis=1)    # [1, 2S]
    w_post = jnp.concatenate([params["w_post_h"], params["w_post_o"]], axis=0)  # [H+L, H]
    w_qout = jnp.concatenate([params["w_mq"], params["w_sq"]], axis=1)    # [H, 2S]
    b_qout = jnp.concatenate([params["b_mq"], params["b_sq"]], axis=1)    # [1, 2S]

    kernel = functools.partial(
        rssm_kernel, num_steps=t_len, batch=b, hidden=HIDDEN_DIM,
        state=STATE_DIM, min_std=MIN_STD_DEV)

    out_shape = (
        jax.ShapeDtypeStruct((b * t_len, HIDDEN_DIM), jnp.float32),     # h_seq slab
        jax.ShapeDtypeStruct((b, HIDDEN_DIM), jnp.float32),             # next_h
        jax.ShapeDtypeStruct((b * t_len, 4 * STATE_DIM), jnp.float32),  # pm|ps|qm|qs
    )

    # Single invocation, no grid: whole problem resident in VMEM.
    h_flat, next_h, dist = pl.pallas_call(
        kernel,
        out_shape=out_shape,
    )(x_flat, obs_flat, mask, h0,
      params["w_lsa"], params["b_lsa"],
      params["w_ih"], params["b_ih"], params["w_hh"], params["b_hh"],
      params["w_prior"], params["b_prior"], w_pout, b_pout,
      w_post, params["b_post"], w_qout, b_qout)

    S = STATE_DIM
    h_seq = h_flat.reshape(b, t_len, HIDDEN_DIM)
    dist = dist.reshape(b, t_len, 4 * S)
    pm, ps = dist[..., 0:S], dist[..., S:2 * S]
    qm, qs = dist[..., 2 * S:3 * S], dist[..., 3 * S:4 * S]
    next_h = next_h[None]                                         # [1,B,H] like torch h_n

    return (pm, ps), (qm, qs), h_seq, next_h


# ----------------------- pure-JAX reference (for checking) -------------------
def rssm_reference(params, prev_state, prev_action, action_lengths,
                   recurrent_hidden_state, latent_observation):
    b, t_len, _ = prev_action.shape
    if prev_state is None:
        prev_state = jnp.zeros((b, t_len, STATE_DIM), prev_action.dtype)
    x = jnp.concatenate([prev_state, prev_action], axis=2)
    h0 = jnp.zeros((b, HIDDEN_DIM), jnp.float32) if recurrent_hidden_state is None \
        else recurrent_hidden_state[0]
    mask = (jnp.arange(t_len)[None, :] < action_lengths[:, None]).astype(jnp.float32)

    enc = jax.nn.relu(x @ params["w_lsa"] + params["b_lsa"])          # [B,T,H]

    def step(h, inp):
        e_t, m_t = inp
        gi = e_t @ params["w_ih"] + params["b_ih"]
        gh = h @ params["w_hh"] + params["b_hh"]
        H = HIDDEN_DIM
        r = jax.nn.sigmoid(gi[:, :H] + gh[:, :H])
        z = jax.nn.sigmoid(gi[:, H:2 * H] + gh[:, H:2 * H])
        n = jnp.tanh(gi[:, 2 * H:] + r * gh[:, 2 * H:])
        h_cand = (1.0 - z) * n + z * h
        h_new = m_t * h_cand + (1.0 - m_t) * h
        return h_new, m_t * h_cand

    h_last, h_seq = jax.lax.scan(
        step, h0, (jnp.swapaxes(enc, 0, 1), jnp.swapaxes(mask, 0, 1)[..., None]))
    h_seq = jnp.swapaxes(h_seq, 0, 1)                                 # [B,T,H]

    hp = jax.nn.relu(h_seq @ params["w_prior"] + params["b_prior"])
    pm = hp @ params["w_mp"] + params["b_mp"]
    ps = jax.nn.softplus(hp @ params["w_sp"] + params["b_sp"]) + MIN_STD_DEV
    hq = jax.nn.relu(h_seq @ params["w_post_h"]
                     + latent_observation @ params["w_post_o"] + params["b_post"])
    qm = hq @ params["w_mq"] + params["b_mq"]
    qs = jax.nn.softplus(hq @ params["w_sq"] + params["b_sq"]) + MIN_STD_DEV
    return (pm, ps), (qm, qs), h_seq, h_last[None]


# ------------------------------ param init -----------------------------------
def init_params(key):
    din = STATE_DIM + ACTION_DIM
    H, S, L = HIDDEN_DIM, STATE_DIM, LATENT_DIM

    def uni(k, shape, fan_in):
        bound = 1.0 / jnp.sqrt(jnp.float32(fan_in))
        return jax.random.uniform(k, shape, jnp.float32, -bound, bound)

    ks = jax.random.split(key, 20)
    params = {
        "w_lsa": uni(ks[0], (din, H), din),  "b_lsa": uni(ks[1], (1, H), din),
        "w_ih": uni(ks[2], (H, 3 * H), H),   "b_ih": uni(ks[3], (1, 3 * H), H),
        "w_hh": uni(ks[4], (H, 3 * H), H),   "b_hh": uni(ks[5], (1, 3 * H), H),
        "w_prior": uni(ks[6], (H, H), H),    "b_prior": uni(ks[7], (1, H), H),
        "w_mp": uni(ks[8], (H, S), H),       "b_mp": uni(ks[9], (1, S), H),
        "w_sp": uni(ks[10], (H, S), H),      "b_sp": uni(ks[11], (1, S), H),
        "w_post_h": uni(ks[12], (H, H), H + L),
        "w_post_o": uni(ks[13], (L, H), H + L),
        "b_post": uni(ks[14], (1, H), H + L),
        "w_mq": uni(ks[15], (H, S), H),      "b_mq": uni(ks[16], (1, S), H),
        "w_sq": uni(ks[17], (H, S), H),      "b_sq": uni(ks[18], (1, S), H),
    }
    return params


# --------------------------------- main ---------------------------------------
if __name__ == "__main__":
    key = jax.random.PRNGKey(0)
    k_par, k_act, k_st, k_obs = jax.random.split(key, 4)

    params = init_params(k_par)

    prev_action = jax.random.normal(k_act, (B, T, ACTION_DIM), jnp.float32)
    prev_state = jax.random.normal(k_st, (B, T, STATE_DIM), jnp.float32)
    latent_observation = jax.random.normal(k_obs, (B, T, LATENT_DIM), jnp.float32)
    action_lengths = jnp.array([T, T - 3], jnp.int32)   # exercises the packed-sequence path
    recurrent_hidden_state = None                       # -> zeros, like torch GRU default

    out = rssm_forward(params, prev_state, prev_action, action_lengths,
                       recurrent_hidden_state, latent_observation)
    out = jax.block_until_ready(out)

    ref = rssm_reference(params, prev_state, prev_action, action_lengths,
                         recurrent_hidden_state, latent_observation)

    for a, b_ in zip(jax.tree_util.tree_leaves(out), jax.tree_util.tree_leaves(ref)):
        assert a.shape == b_.shape, (a.shape, b_.shape)
        assert jnp.allclose(a, b_, rtol=1e-3, atol=1e-3), float(jnp.max(jnp.abs(a - b_)))

    print("KERNEL_OK")
</pallas_src>

<mosaic_0001>
module attributes {stable_mosaic.version = 11 : i64} {
  func.func @rssm_kernel(%arg0: memref<16x12xf32, #tpu.memory_space<vmem>>, %arg1: memref<16x64xf32, #tpu.memory_space<vmem>>, %arg2: memref<2x8xf32, #tpu.memory_space<vmem>>, %arg3: memref<2x32xf32, #tpu.memory_space<vmem>>, %arg4: memref<12x32xf32, #tpu.memory_space<vmem>>, %arg5: memref<1x32xf32, #tpu.memory_space<vmem>>, %arg6: memref<32x96xf32, #tpu.memory_space<vmem>>, %arg7: memref<1x96xf32, #tpu.memory_space<vmem>>, %arg8: memref<32x96xf32, #tpu.memory_space<vmem>>, %arg9: memref<1x96xf32, #tpu.memory_space<vmem>>, %arg10: memref<32x32xf32, #tpu.memory_space<vmem>>, %arg11: memref<1x32xf32, #tpu.memory_space<vmem>>, %arg12: memref<32x16xf32, #tpu.memory_space<vmem>>, %arg13: memref<1x16xf32, #tpu.memory_space<vmem>>, %arg14: memref<96x32xf32, #tpu.memory_space<vmem>>, %arg15: memref<1x32xf32, #tpu.memory_space<vmem>>, %arg16: memref<32x16xf32, #tpu.memory_space<vmem>>, %arg17: memref<1x16xf32, #tpu.memory_space<vmem>>, %arg18: memref<16x32xf32, #tpu.memory_space<vmem>>, %arg19: memref<2x32xf32, #tpu.memory_space<vmem>>, %arg20: memref<16x32xf32, #tpu.memory_space<vmem>>) attributes {dimension_semantics = [], scalar_prefetch = 0 : i64, scratch_operands = 0 : i64, tpu.core_type = #tpu.core_type<tc>} {
    %c0 = arith.constant 0 : index
    %c0_0 = arith.constant 0 : index
    %0 = vector.load %arg0[%c0, %c0_0] : memref<16x12xf32, #tpu.memory_space<vmem>>, vector<16x12xf32>
    %c0_1 = arith.constant 0 : index
    %c0_2 = arith.constant 0 : index
    %1 = vector.load %arg4[%c0_1, %c0_2] : memref<12x32xf32, #tpu.memory_space<vmem>>, vector<12x32xf32>
    %cst = arith.constant dense<0.000000e+00> : vector<16x32xf32>
    %2 = tpu.matmul %0, %1, %cst {dimension_numbers = #tpu.dot_dimension_numbers<[1], [0], [0], [1], [0, 0, 1, 1], [], []>} : vector<16x12xf32>, vector<12x32xf32>, vector<16x32xf32> -> vector<16x32xf32>
    %c0_3 = arith.constant 0 : index
    %c0_4 = arith.constant 0 : index
    %3 = vector.load %arg5[%c0_3, %c0_4] : memref<1x32xf32, #tpu.memory_space<vmem>>, vector<1x32xf32>
    %4 = vector.broadcast %3 : vector<1x32xf32> to vector<16x32xf32>
    %5 = arith.addf %2, %4 : vector<16x32xf32>
    %cst_5 = arith.constant 0.000000e+00 : f32
    %6 = vector.broadcast %cst_5 : f32 to vector<16x32xf32>
    %7 = arith.maximumf %5, %6 : vector<16x32xf32>
    %c0_6 = arith.constant 0 : index
    %c0_7 = arith.constant 0 : index
    %8 = vector.load %arg6[%c0_6, %c0_7] : memref<32x96xf32, #tpu.memory_space<vmem>>, vector<32x96xf32>
    %cst_8 = arith.constant dense<0.000000e+00> : vector<16x96xf32>
    %9 = tpu.matmul %7, %8, %cst_8 {dimension_numbers = #tpu.dot_dimension_numbers<[1], [0], [0], [1], [0, 0, 1, 1], [], []>} : vector<16x32xf32>, vector<32x96xf32>, vector<16x96xf32> -> vector<16x96xf32>
    %c0_9 = arith.constant 0 : index
    %c0_10 = arith.constant 0 : index
    %10 = vector.load %arg7[%c0_9, %c0_10] : memref<1x96xf32, #tpu.memory_space<vmem>>, vector<1x96xf32>
    %11 = vector.broadcast %10 : vector<1x96xf32> to vector<16x96xf32>
    %12 = arith.addf %9, %11 : vector<16x96xf32>
    %13 = vector.shape_cast %12 : vector<16x96xf32> to vector<2x8x96xf32>
    %c0_11 = arith.constant 0 : index
    %c0_12 = arith.constant 0 : index
    %14 = vector.load %arg2[%c0_11, %c0_12] : memref<2x8xf32, #tpu.memory_space<vmem>>, vector<2x8xf32>
    %c0_13 = arith.constant 0 : index
    %c0_14 = arith.constant 0 : index
    %15 = vector.load %arg8[%c0_13, %c0_14] : memref<32x96xf32, #tpu.memory_space<vmem>>, vector<32x96xf32>
    %c0_15 = arith.constant 0 : index
    %c0_16 = arith.constant 0 : index
    %16 = vector.load %arg9[%c0_15, %c0_16] : memref<1x96xf32, #tpu.memory_space<vmem>>, vector<1x96xf32>
    %c0_17 = arith.constant 0 : index
    %c0_18 = arith.constant 0 : index
    %17 = vector.load %arg3[%c0_17, %c0_18] : memref<2x32xf32, #tpu.memory_space<vmem>>, vector<2x32xf32>
    %18 = vector.extract_strided_slice %13 {offsets = [0, 0, 0], sizes = [2, 1, 96], strides = [1, 1, 1]} : vector<2x8x96xf32> to vector<2x1x96xf32>
    %19 = vector.shape_cast %18 : vector<2x1x96xf32> to vector<2x96xf32>
    %cst_19 = arith.constant dense<0.000000e+00> : vector<2x96xf32>
    %20 = tpu.matmul %17, %15, %cst_19 {dimension_numbers = #tpu.dot_dimension_numbers<[1], [0], [0], [1], [0, 0, 1, 1], [], []>} : vector<2x32xf32>, vector<32x96xf32>, vector<2x96xf32> -> vector<2x96xf32>
    %21 = vector.broadcast %16 : vector<1x96xf32> to vector<2x96xf32>
    %22 = arith.addf %20, %21 : vector<2x96xf32>
    %23 = vector.extract_strided_slice %19 {offsets = [0, 0], sizes = [2, 32], strides = [1, 1]} : vector<2x96xf32> to vector<2x32xf32>
    %24 = vector.extract_strided_slice %22 {offsets = [0, 0], sizes = [2, 32], strides = [1, 1]} : vector<2x96xf32> to vector<2x32xf32>
    %25 = arith.addf %23, %24 : vector<2x32xf32>
    %26 = arith.negf %25 : vector<2x32xf32>
    %27 = math.exp %26 : vector<2x32xf32>
    %cst_20 = arith.constant 1.000000e+00 : f32
    %28 = vector.broadcast %cst_20 : f32 to vector<2x32xf32>
    %29 = arith.addf %28, %27 : vector<2x32xf32>
    %30 = arith.divf %28, %29 : vector<2x32xf32>
    %31 = vector.extract_strided_slice %19 {offsets = [0, 32], sizes = [2, 32], strides = [1, 1]} : vector<2x96xf32> to vector<2x32xf32>
    %32 = vector.extract_strided_slice %22 {offsets = [0, 32], sizes = [2, 32], strides = [1, 1]} : vector<2x96xf32> to vector<2x32xf32>
    %33 = arith.addf %31, %32 : vector<2x32xf32>
    %34 = arith.negf %33 : vector<2x32xf32>
    %35 = math.exp %34 : vector<2x32xf32>
    %cst_21 = arith.constant 1.000000e+00 : f32
    %36 = vector.broadcast %cst_21 : f32 to vector<2x32xf32>
    %37 = arith.addf %36, %35 : vector<2x32xf32>
    %38 = arith.divf %36, %37 : vector<2x32xf32>
    %39 = vector.extract_strided_slice %19 {offsets = [0, 64], sizes = [2, 32], strides = [1, 1]} : vector<2x96xf32> to vector<2x32xf32>
    %40 = vector.extract_strided_slice %22 {offsets = [0, 64], sizes = [2, 32], strides = [1, 1]} : vector<2x96xf32> to vector<2x32xf32>
    %41 = arith.mulf %30, %40 : vector<2x32xf32>
    %42 = arith.addf %39, %41 : vector<2x32xf32>
    %43 = math.tanh %42 : vector<2x32xf32>
    %cst_22 = arith.constant 1.000000e+00 : f32
    %44 = vector.broadcast %cst_22 : f32 to vector<2x32xf32>
    %45 = arith.subf %44, %38 : vector<2x32xf32>
    %46 = arith.mulf %45, %43 : vector<2x32xf32>
    %47 = arith.mulf %38, %17 : vector<2x32xf32>
    %48 = arith.addf %46, %47 : vector<2x32xf32>
    %49 = vector.extract_strided_slice %14 {offsets = [0, 0], sizes = [2, 1], strides = [1, 1]} : vector<2x8xf32> to vector<2x1xf32>
    %50 = vector.broadcast %49 : vector<2x1xf32> to vector<2x32xf32>
    %51 = arith.mulf %50, %48 : vector<2x32xf32>
    %cst_23 = arith.constant 1.000000e+00 : f32
    %52 = vector.broadcast %cst_23 : f32 to vector<2x1xf32>
    %53 = arith.subf %52, %49 : vector<2x1xf32>
    %54 = vector.broadcast %53 : vector<2x1xf32> to vector<2x32xf32>
    %55 = arith.mulf %54, %17 : vector<2x32xf32>
    %56 = arith.addf %51, %55 : vector<2x32xf32>
    %57 = vector.broadcast %49 : vector<2x1xf32> to vector<2x32xf32>
    %58 = arith.mulf %57, %48 : vector<2x32xf32>
    %59 = vector.extract_strided_slice %13 {offsets = [0, 1, 0], sizes = [2, 1, 96], strides = [1, 1, 1]} : vector<2x8x96xf32> to vector<2x1x96xf32>
    %60 = vector.shape_cast %59 : vector<2x1x96xf32> to vector<2x96xf32>
    %cst_24 = arith.constant dense<0.000000e+00> : vector<2x96xf32>
    %61 = tpu.matmul %56, %15, %cst_24 {dimension_numbers = #tpu.dot_dimension_numbers<[1], [0], [0], [1], [0, 0, 1, 1], [], []>} : vector<2x32xf32>, vector<32x96xf32>, vector<2x96xf32> -> vector<2x96xf32>
    %62 = vector.broadcast %16 : vector<1x96xf32> to vector<2x96xf32>
    %63 = arith.addf %61, %62 : vector<2x96xf32>
    %64 = vector.extract_strided_slice %60 {offsets = [0, 0], sizes = [2, 32], strides = [1, 1]} : vector<2x96xf32> to vector<2x32xf32>
    %65 = vector.extract_strided_slice %63 {offsets = [0, 0], sizes = [2, 32], strides = [1, 1]} : vector<2x96xf32> to vector<2x32xf32>
    %66 = arith.addf %64, %65 : vector<2x32xf32>
    %67 = arith.negf %66 : vector<2x32xf32>
    %68 = math.exp %67 : vector<2x32xf32>
    %cst_25 = arith.constant 1.000000e+00 : f32
    %69 = vector.broadcast %cst_25 : f32 to vector<2x32xf32>
    %70 = arith.addf %69, %68 : vector<2x32xf32>
    %71 = arith.divf %69, %70 : vector<2x32xf32>
    %72 = vector.extract_strided_slice %60 {offsets = [0, 32], sizes = [2, 32], strides = [1, 1]} : vector<2x96xf32> to vector<2x32xf32>
    %73 = vector.extract_strided_slice %63 {offsets = [0, 32], sizes = [2, 32], strides = [1, 1]} : vector<2x96xf32> to vector<2x32xf32>
    %74 = arith.addf %72, %73 : vector<2x32xf32>
    %75 = arith.negf %74 : vector<2x32xf32>
    %76 = math.exp %75 : vector<2x32xf32>
    %cst_26 = arith.constant 1.000000e+00 : f32
    %77 = vector.broadcast %cst_26 : f32 to vector<2x32xf32>
    %78 = arith.addf %77, %76 : vector<2x32xf32>
    %79 = arith.divf %77, %78 : vector<2x32xf32>
    %80 = vector.extract_strided_slice %60 {offsets = [0, 64], sizes = [2, 32], strides = [1, 1]} : vector<2x96xf32> to vector<2x32xf32>
    %81 = vector.extract_strided_slice %63 {offsets = [0, 64], sizes = [2, 32], strides = [1, 1]} : vector<2x96xf32> to vector<2x32xf32>
    %82 = arith.mulf %71, %81 : vector<2x32xf32>
    %83 = arith.addf %80, %82 : vector<2x32xf32>
    %84 = math.tanh %83 : vector<2x32xf32>
    %cst_27 = arith.constant 1.000000e+00 : f32
    %85 = vector.broadcast %cst_27 : f32 to vector<2x32xf32>
    %86 = arith.subf %85, %79 : vector<2x32xf32>
    %87 = arith.mulf %86, %84 : vector<2x32xf32>
    %88 = arith.mulf %79, %56 : vector<2x32xf32>
    %89 = arith.addf %87, %88 : vector<2x32xf32>
    %90 = vector.extract_strided_slice %14 {offsets = [0, 1], sizes = [2, 1], strides = [1, 1]} : vector<2x8xf32> to vector<2x1xf32>
    %91 = vector.broadcast %90 : vector<2x1xf32> to vector<2x32xf32>
    %92 = arith.mulf %91, %89 : vector<2x32xf32>
    %cst_28 = arith.constant 1.000000e+00 : f32
    %93 = vector.broadcast %cst_28 : f32 to vector<2x1xf32>
    %94 = arith.subf %93, %90 : vector<2x1xf32>
    %95 = vector.broadcast %94 : vector<2x1xf32> to vector<2x32xf32>
    %96 = arith.mulf %95, %56 : vector<2x32xf32>
    %97 = arith.addf %92, %96 : vector<2x32xf32>
    %98 = vector.broadcast %90 : vector<2x1xf32> to vector<2x32xf32>
    %99 = arith.mulf %98, %89 : vector<2x32xf32>
    %100 = vector.extract_strided_slice %13 {offsets = [0, 2, 0], sizes = [2, 1, 96], strides = [1, 1, 1]} : vector<2x8x96xf32> to vector<2x1x96xf32>
    %101 = vector.shape_cast %100 : vector<2x1x96xf32> to vector<2x96xf32>
    %cst_29 = arith.constant dense<0.000000e+00> : vector<2x96xf32>
    %102 = tpu.matmul %97, %15, %cst_29 {dimension_numbers = #tpu.dot_dimension_numbers<[1], [0], [0], [1], [0, 0, 1, 1], [], []>} : vector<2x32xf32>, vector<32x96xf32>, vector<2x96xf32> -> vector<2x96xf32>
    %103 = vector.broadcast %16 : vector<1x96xf32> to vector<2x96xf32>
    %104 = arith.addf %102, %103 : vector<2x96xf32>
    %105 = vector.extract_strided_slice %101 {offsets = [0, 0], sizes = [2, 32], strides = [1, 1]} : vector<2x96xf32> to vector<2x32xf32>
    %106 = vector.extract_strided_slice %104 {offsets = [0, 0], sizes = [2, 32], strides = [1, 1]} : vector<2x96xf32> to vector<2x32xf32>
    %107 = arith.addf %105, %106 : vector<2x32xf32>
    %108 = arith.negf %107 : vector<2x32xf32>
    %109 = math.exp %108 : vector<2x32xf32>
    %cst_30 = arith.constant 1.000000e+00 : f32
    %110 = vector.broadcast %cst_30 : f32 to vector<2x32xf32>
    %111 = arith.addf %110, %109 : vector<2x32xf32>
    %112 = arith.divf %110, %111 : vector<2x32xf32>
    %113 = vector.extract_strided_slice %101 {offsets = [0, 32], sizes = [2, 32], strides = [1, 1]} : vector<2x96xf32> to vector<2x32xf32>
    %114 = vector.extract_strided_slice %104 {offsets = [0, 32], sizes = [2, 32], strides = [1, 1]} : vector<2x96xf32> to vector<2x32xf32>
    %115 = arith.addf %113, %114 : vector<2x32xf32>
    %116 = arith.negf %115 : vector<2x32xf32>
    %117 = math.exp %116 : vector<2x32xf32>
    %cst_31 = arith.constant 1.000000e+00 : f32
    %118 = vector.broadcast %cst_31 : f32 to vector<2x32xf32>
    %119 = arith.addf %118, %117 : vector<2x32xf32>
    %120 = arith.divf %118, %119 : vector<2x32xf32>
    %121 = vector.extract_strided_slice %101 {offsets = [0, 64], sizes = [2, 32], strides = [1, 1]} : vector<2x96xf32> to vector<2x32xf32>
    %122 = vector.extract_strided_slice %104 {offsets = [0, 64], sizes = [2, 32], strides = [1, 1]} : vector<2x96xf32> to vector<2x32xf32>
    %123 = arith.mulf %112, %122 : vector<2x32xf32>
    %124 = arith.addf %121, %123 : vector<2x32xf32>
    %125 = math.tanh %124 : vector<2x32xf32>
    %cst_32 = arith.constant 1.000000e+00 : f32
    %126 = vector.broadcast %cst_32 : f32 to vector<2x32xf32>
    %127 = arith.subf %126, %120 : vector<2x32xf32>
    %128 = arith.mulf %127, %125 : vector<2x32xf32>
    %129 = arith.mulf %120, %97 : vector<2x32xf32>
    %130 = arith.addf %128, %129 : vector<2x32xf32>
    %131 = vector.extract_strided_slice %14 {offsets = [0, 2], sizes = [2, 1], strides = [1, 1]} : vector<2x8xf32> to vector<2x1xf32>
    %132 = vector.broadcast %131 : vector<2x1xf32> to vector<2x32xf32>
    %133 = arith.mulf %132, %130 : vector<2x32xf32>
    %cst_33 = arith.constant 1.000000e+00 : f32
    %134 = vector.broadcast %cst_33 : f32 to vector<2x1xf32>
    %135 = arith.subf %134, %131 : vector<2x1xf32>
    %136 = vector.broadcast %135 : vector<2x1xf32> to vector<2x32xf32>
    %137 = arith.mulf %136, %97 : vector<2x32xf32>
    %138 = arith.addf %133, %137 : vector<2x32xf32>
    %139 = vector.broadcast %131 : vector<2x1xf32> to vector<2x32xf32>
    %140 = arith.mulf %139, %130 : vector<2x32xf32>
    %141 = vector.extract_strided_slice %13 {offsets = [0, 3, 0], sizes = [2, 1, 96], strides = [1, 1, 1]} : vector<2x8x96xf32> to vector<2x1x96xf32>
    %142 = vector.shape_cast %141 : vector<2x1x96xf32> to vector<2x96xf32>
    %cst_34 = arith.constant dense<0.000000e+00> : vector<2x96xf32>
    %143 = tpu.matmul %138, %15, %cst_34 {dimension_numbers = #tpu.dot_dimension_numbers<[1], [0], [0], [1], [0, 0, 1, 1], [], []>} : vector<2x32xf32>, vector<32x96xf32>, vector<2x96xf32> -> vector<2x96xf32>
    %144 = vector.broadcast %16 : vector<1x96xf32> to vector<2x96xf32>
    %145 = arith.addf %143, %144 : vector<2x96xf32>
    %146 = vector.extract_strided_slice %142 {offsets = [0, 0], sizes = [2, 32], strides = [1, 1]} : vector<2x96xf32> to vector<2x32xf32>
    %147 = vector.extract_strided_slice %145 {offsets = [0, 0], sizes = [2, 32], strides = [1, 1]} : vector<2x96xf32> to vector<2x32xf32>
    %148 = arith.addf %146, %147 : vector<2x32xf32>
    %149 = arith.negf %148 : vector<2x32xf32>
    %150 = math.exp %149 : vector<2x32xf32>
    %cst_35 = arith.constant 1.000000e+00 : f32
    %151 = vector.broadcast %cst_35 : f32 to vector<2x32xf32>
    %152 = arith.addf %151, %150 : vector<2x32xf32>
    %153 = arith.divf %151, %152 : vector<2x32xf32>
    %154 = vector.extract_strided_slice %142 {offsets = [0, 32], sizes = [2, 32], strides = [1, 1]} : vector<2x96xf32> to vector<2x32xf32>
    %155 = vector.extract_strided_slice %145 {offsets = [0, 32], sizes = [2, 32], strides = [1, 1]} : vector<2x96xf32> to vector<2x32xf32>
    %156 = arith.addf %154, %155 : vector<2x32xf32>
    %157 = arith.negf %156 : vector<2x32xf32>
    %158 = math.exp %157 : vector<2x32xf32>
    %cst_36 = arith.constant 1.000000e+00 : f32
    %159 = vector.broadcast %cst_36 : f32 to vector<2x32xf32>
    %160 = arith.addf %159, %158 : vector<2x32xf32>
    %161 = arith.divf %159, %160 : vector<2x32xf32>
    %162 = vector.extract_strided_slice %142 {offsets = [0, 64], sizes = [2, 32], strides = [1, 1]} : vector<2x96xf32> to vector<2x32xf32>
    %163 = vector.extract_strided_slice %145 {offsets = [0, 64], sizes = [2, 32], strides = [1, 1]} : vector<2x96xf32> to vector<2x32xf32>
    %164 = arith.mulf %153, %163 : vector<2x32xf32>
    %165 = arith.addf %162, %164 : vector<2x32xf32>
    %166 = math.tanh %165 : vector<2x32xf32>
    %cst_37 = arith.constant 1.000000e+00 : f32
    %167 = vector.broadcast %cst_37 : f32 to vector<2x32xf32>
    %168 = arith.subf %167, %161 : vector<2x32xf32>
    %169 = arith.mulf %168, %166 : vector<2x32xf32>
    %170 = arith.mulf %161, %138 : vector<2x32xf32>
    %171 = arith.addf %169, %170 : vector<2x32xf32>
    %172 = vector.extract_strided_slice %14 {offsets = [0, 3], sizes = [2, 1], strides = [1, 1]} : vector<2x8xf32> to vector<2x1xf32>
    %173 = vector.broadcast %172 : vector<2x1xf32> to vector<2x32xf32>
    %174 = arith.mulf %173, %171 : vector<2x32xf32>
    %cst_38 = arith.constant 1.000000e+00 : f32
    %175 = vector.broadcast %cst_38 : f32 to vector<2x1xf32>
    %176 = arith.subf %175, %172 : vector<2x1xf32>
    %177 = vector.broadcast %176 : vector<2x1xf32> to vector<2x32xf32>
    %178 = arith.mulf %177, %138 : vector<2x32xf32>
    %179 = arith.addf %174, %178 : vector<2x32xf32>
    %180 = vector.broadcast %172 : vector<2x1xf32> to vector<2x32xf32>
    %181 = arith.mulf %180, %171 : vector<2x32xf32>
    %182 = vector.extract_strided_slice %13 {offsets = [0, 4, 0], sizes = [2, 1, 96], strides = [1, 1, 1]} : vector<2x8x96xf32> to vector<2x1x96xf32>
    %183 = vector.shape_cast %182 : vector<2x1x96xf32> to vector<2x96xf32>
    %cst_39 = arith.constant dense<0.000000e+00> : vector<2x96xf32>
    %184 = tpu.matmul %179, %15, %cst_39 {dimension_numbers = #tpu.dot_dimension_numbers<[1], [0], [0], [1], [0, 0, 1, 1], [], []>} : vector<2x32xf32>, vector<32x96xf32>, vector<2x96xf32> -> vector<2x96xf32>
    %185 = vector.broadcast %16 : vector<1x96xf32> to vector<2x96xf32>
    %186 = arith.addf %184, %185 : vector<2x96xf32>
    %187 = vector.extract_strided_slice %183 {offsets = [0, 0], sizes = [2, 32], strides = [1, 1]} : vector<2x96xf32> to vector<2x32xf32>
    %188 = vector.extract_strided_slice %186 {offsets = [0, 0], sizes = [2, 32], strides = [1, 1]} : vector<2x96xf32> to vector<2x32xf32>
    %189 = arith.addf %187, %188 : vector<2x32xf32>
    %190 = arith.negf %189 : vector<2x32xf32>
    %191 = math.exp %190 : vector<2x32xf32>
    %cst_40 = arith.constant 1.000000e+00 : f32
    %192 = vector.broadcast %cst_40 : f32 to vector<2x32xf32>
    %193 = arith.addf %192, %191 : vector<2x32xf32>
    %194 = arith.divf %192, %193 : vector<2x32xf32>
    %195 = vector.extract_strided_slice %183 {offsets = [0, 32], sizes = [2, 32], strides = [1, 1]} : vector<2x96xf32> to vector<2x32xf32>
    %196 = vector.extract_strided_slice %186 {offsets = [0, 32], sizes = [2, 32], strides = [1, 1]} : vector<2x96xf32> to vector<2x32xf32>
    %197 = arith.addf %195, %196 : vector<2x32xf32>
    %198 = arith.negf %197 : vector<2x32xf32>
    %199 = math.exp %198 : vector<2x32xf32>
    %cst_41 = arith.constant 1.000000e+00 : f32
    %200 = vector.broadcast %cst_41 : f32 to vector<2x32xf32>
    %201 = arith.addf %200, %199 : vector<2x32xf32>
    %202 = arith.divf %200, %201 : vector<2x32xf32>
    %203 = vector.extract_strided_slice %183 {offsets = [0, 64], sizes = [2, 32], strides = [1, 1]} : vector<2x96xf32> to vector<2x32xf32>
    %204 = vector.extract_strided_slice %186 {offsets = [0, 64], sizes = [2, 32], strides = [1, 1]} : vector<2x96xf32> to vector<2x32xf32>
    %205 = arith.mulf %194, %204 : vector<2x32xf32>
    %206 = arith.addf %203, %205 : vector<2x32xf32>
    %207 = math.tanh %206 : vector<2x32xf32>
    %cst_42 = arith.constant 1.000000e+00 : f32
    %208 = vector.broadcast %cst_42 : f32 to vector<2x32xf32>
    %209 = arith.subf %208, %202 : vector<2x32xf32>
    %210 = arith.mulf %209, %207 : vector<2x32xf32>
    %211 = arith.mulf %202, %179 : vector<2x32xf32>
    %212 = arith.addf %210, %211 : vector<2x32xf32>
    %213 = vector.extract_strided_slice %14 {offsets = [0, 4], sizes = [2, 1], strides = [1, 1]} : vector<2x8xf32> to vector<2x1xf32>
    %214 = vector.broadcast %213 : vector<2x1xf32> to vector<2x32xf32>
    %215 = arith.mulf %214, %212 : vector<2x32xf32>
    %cst_43 = arith.constant 1.000000e+00 : f32
    %216 = vector.broadcast %cst_43 : f32 to vector<2x1xf32>
    %217 = arith.subf %216, %213 : vector<2x1xf32>
    %218 = vector.broadcast %217 : vector<2x1xf32> to vector<2x32xf32>
    %219 = arith.mulf %218, %179 : vector<2x32xf32>
    %220 = arith.addf %215, %219 : vector<2x32xf32>
    %221 = vector.broadcast %213 : vector<2x1xf32> to vector<2x32xf32>
    %222 = arith.mulf %221, %212 : vector<2x32xf32>
    %223 = vector.extract_strided_slice %13 {offsets = [0, 5, 0], sizes = [2, 1, 96], strides = [1, 1, 1]} : vector<2x8x96xf32> to vector<2x1x96xf32>
    %224 = vector.shape_cast %223 : vector<2x1x96xf32> to vector<2x96xf32>
    %cst_44 = arith.constant dense<0.000000e+00> : vector<2x96xf32>
    %225 = tpu.matmul %220, %15, %cst_44 {dimension_numbers = #tpu.dot_dimension_numbers<[1], [0], [0], [1], [0, 0, 1, 1], [], []>} : vector<2x32xf32>, vector<32x96xf32>, vector<2x96xf32> -> vector<2x96xf32>
    %226 = vector.broadcast %16 : vector<1x96xf32> to vector<2x96xf32>
    %227 = arith.addf %225, %226 : vector<2x96xf32>
    %228 = vector.extract_strided_slice %224 {offsets = [0, 0], sizes = [2, 32], strides = [1, 1]} : vector<2x96xf32> to vector<2x32xf32>
    %229 = vector.extract_strided_slice %227 {offsets = [0, 0], sizes = [2, 32], strides = [1, 1]} : vector<2x96xf32> to vector<2x32xf32>
    %230 = arith.addf %228, %229 : vector<2x32xf32>
    %231 = arith.negf %230 : vector<2x32xf32>
    %232 = math.exp %231 : vector<2x32xf32>
    %cst_45 = arith.constant 1.000000e+00 : f32
    %233 = vector.broadcast %cst_45 : f32 to vector<2x32xf32>
    %234 = arith.addf %233, %232 : vector<2x32xf32>
    %235 = arith.divf %233, %234 : vector<2x32xf32>
    %236 = vector.extract_strided_slice %224 {offsets = [0, 32], sizes = [2, 32], strides = [1, 1]} : vector<2x96xf32> to vector<2x32xf32>
    %237 = vector.extract_strided_slice %227 {offsets = [0, 32], sizes = [2, 32], strides = [1, 1]} : vector<2x96xf32> to vector<2x32xf32>
    %238 = arith.addf %236, %237 : vector<2x32xf32>
    %239 = arith.negf %238 : vector<2x32xf32>
    %240 = math.exp %239 : vector<2x32xf32>
    %cst_46 = arith.constant 1.000000e+00 : f32
    %241 = vector.broadcast %cst_46 : f32 to vector<2x32xf32>
    %242 = arith.addf %241, %240 : vector<2x32xf32>
    %243 = arith.divf %241, %242 : vector<2x32xf32>
    %244 = vector.extract_strided_slice %224 {offsets = [0, 64], sizes = [2, 32], strides = [1, 1]} : vector<2x96xf32> to vector<2x32xf32>
    %245 = vector.extract_strided_slice %227 {offsets = [0, 64], sizes = [2, 32], strides = [1, 1]} : vector<2x96xf32> to vector<2x32xf32>
    %246 = arith.mulf %235, %245 : vector<2x32xf32>
    %247 = arith.addf %244, %246 : vector<2x32xf32>
    %248 = math.tanh %247 : vector<2x32xf32>
    %cst_47 = arith.constant 1.000000e+00 : f32
    %249 = vector.broadcast %cst_47 : f32 to vector<2x32xf32>
    %250 = arith.subf %249, %243 : vector<2x32xf32>
    %251 = arith.mulf %250, %248 : vector<2x32xf32>
    %252 = arith.mulf %243, %220 : vector<2x32xf32>
    %253 = arith.addf %251, %252 : vector<2x32xf32>
    %254 = vector.extract_strided_slice %14 {offsets = [0, 5], sizes = [2, 1], strides = [1, 1]} : vector<2x8xf32> to vector<2x1xf32>
    %255 = vector.broadcast %254 : vector<2x1xf32> to vector<2x32xf32>
    %256 = arith.mulf %255, %253 : vector<2x32xf32>
    %cst_48 = arith.constant 1.000000e+00 : f32
    %257 = vector.broadcast %cst_48 : f32 to vector<2x1xf32>
    %258 = arith.subf %257, %254 : vector<2x1xf32>
    %259 = vector.broadcast %258 : vector<2x1xf32> to vector<2x32xf32>
    %260 = arith.mulf %259, %220 : vector<2x32xf32>
    %261 = arith.addf %256, %260 : vector<2x32xf32>
    %262 = vector.broadcast %254 : vector<2x1xf32> to vector<2x32xf32>
    %263 = arith.mulf %262, %253 : vector<2x32xf32>
    %264 = vector.extract_strided_slice %13 {offsets = [0, 6, 0], sizes = [2, 1, 96], strides = [1, 1, 1]} : vector<2x8x96xf32> to vector<2x1x96xf32>
    %265 = vector.shape_cast %264 : vector<2x1x96xf32> to vector<2x96xf32>
    %cst_49 = arith.constant dense<0.000000e+00> : vector<2x96xf32>
    %266 = tpu.matmul %261, %15, %cst_49 {dimension_numbers = #tpu.dot_dimension_numbers<[1], [0], [0], [1], [0, 0, 1, 1], [], []>} : vector<2x32xf32>, vector<32x96xf32>, vector<2x96xf32> -> vector<2x96xf32>
    %267 = vector.broadcast %16 : vector<1x96xf32> to vector<2x96xf32>
    %268 = arith.addf %266, %267 : vector<2x96xf32>
    %269 = vector.extract_strided_slice %265 {offsets = [0, 0], sizes = [2, 32], strides = [1, 1]} : vector<2x96xf32> to vector<2x32xf32>
    %270 = vector.extract_strided_slice %268 {offsets = [0, 0], sizes = [2, 32], strides = [1, 1]} : vector<2x96xf32> to vector<2x32xf32>
    %271 = arith.addf %269, %270 : vector<2x32xf32>
    %272 = arith.negf %271 : vector<2x32xf32>
    %273 = math.exp %272 : vector<2x32xf32>
    %cst_50 = arith.constant 1.000000e+00 : f32
    %274 = vector.broadcast %cst_50 : f32 to vector<2x32xf32>
    %275 = arith.addf %274, %273 : vector<2x32xf32>
    %276 = arith.divf %274, %275 : vector<2x32xf32>
    %277 = vector.extract_strided_slice %265 {offsets = [0, 32], sizes = [2, 32], strides = [1, 1]} : vector<2x96xf32> to vector<2x32xf32>
    %278 = vector.extract_strided_slice %268 {offsets = [0, 32], sizes = [2, 32], strides = [1, 1]} : vector<2x96xf32> to vector<2x32xf32>
    %279 = arith.addf %277, %278 : vector<2x32xf32>
    %280 = arith.negf %279 : vector<2x32xf32>
    %281 = math.exp %280 : vector<2x32xf32>
    %cst_51 = arith.constant 1.000000e+00 : f32
    %282 = vector.broadcast %cst_51 : f32 to vector<2x32xf32>
    %283 = arith.addf %282, %281 : vector<2x32xf32>
    %284 = arith.divf %282, %283 : vector<2x32xf32>
    %285 = vector.extract_strided_slice %265 {offsets = [0, 64], sizes = [2, 32], strides = [1, 1]} : vector<2x96xf32> to vector<2x32xf32>
    %286 = vector.extract_strided_slice %268 {offsets = [0, 64], sizes = [2, 32], strides = [1, 1]} : vector<2x96xf32> to vector<2x32xf32>
    %287 = arith.mulf %276, %286 : vector<2x32xf32>
    %288 = arith.addf %285, %287 : vector<2x32xf32>
    %289 = math.tanh %288 : vector<2x32xf32>
    %cst_52 = arith.constant 1.000000e+00 : f32
    %290 = vector.broadcast %cst_52 : f32 to vector<2x32xf32>
    %291 = arith.subf %290, %284 : vector<2x32xf32>
    %292 = arith.mulf %291, %289 : vector<2x32xf32>
    %293 = arith.mulf %284, %261 : vector<2x32xf32>
    %294 = arith.addf %292, %293 : vector<2x32xf32>
    %295 = vector.extract_strided_slice %14 {offsets = [0, 6], sizes = [2, 1], strides = [1, 1]} : vector<2x8xf32> to vector<2x1xf32>
    %296 = vector.broadcast %295 : vector<2x1xf32> to vector<2x32xf32>
    %297 = arith.mulf %296, %294 : vector<2x32xf32>
    %cst_53 = arith.constant 1.000000e+00 : f32
    %298 = vector.broadcast %cst_53 : f32 to vector<2x1xf32>
    %299 = arith.subf %298, %295 : vector<2x1xf32>
    %300 = vector.broadcast %299 : vector<2x1xf32> to vector<2x32xf32>
    %301 = arith.mulf %300, %261 : vector<2x32xf32>
    %302 = arith.addf %297, %301 : vector<2x32xf32>
    %303 = vector.broadcast %295 : vector<2x1xf32> to vector<2x32xf32>
    %304 = arith.mulf %303, %294 : vector<2x32xf32>
    %305 = vector.extract_strided_slice %13 {offsets = [0, 7, 0], sizes = [2, 1, 96], strides = [1, 1, 1]} : vector<2x8x96xf32> to vector<2x1x96xf32>
    %306 = vector.shape_cast %305 : vector<2x1x96xf32> to vector<2x96xf32>
    %cst_54 = arith.constant dense<0.000000e+00> : vector<2x96xf32>
    %307 = tpu.matmul %302, %15, %cst_54 {dimension_numbers = #tpu.dot_dimension_numbers<[1], [0], [0], [1], [0, 0, 1, 1], [], []>} : vector<2x32xf32>, vector<32x96xf32>, vector<2x96xf32> -> vector<2x96xf32>
    %308 = vector.broadcast %16 : vector<1x96xf32> to vector<2x96xf32>
    %309 = arith.addf %307, %308 : vector<2x96xf32>
    %310 = vector.extract_strided_slice %306 {offsets = [0, 0], sizes = [2, 32], strides = [1, 1]} : vector<2x96xf32> to vector<2x32xf32>
    %311 = vector.extract_strided_slice %309 {offsets = [0, 0], sizes = [2, 32], strides = [1, 1]} : vector<2x96xf32> to vector<2x32xf32>
    %312 = arith.addf %310, %311 : vector<2x32xf32>
    %313 = arith.negf %312 : vector<2x32xf32>
    %314 = math.exp %313 : vector<2x32xf32>
    %cst_55 = arith.constant 1.000000e+00 : f32
    %315 = vector.broadcast %cst_55 : f32 to vector<2x32xf32>
    %316 = arith.addf %315, %314 : vector<2x32xf32>
    %317 = arith.divf %315, %316 : vector<2x32xf32>
    %318 = vector.extract_strided_slice %306 {offsets = [0, 32], sizes = [2, 32], strides = [1, 1]} : vector<2x96xf32> to vector<2x32xf32>
    %319 = vector.extract_strided_slice %309 {offsets = [0, 32], sizes = [2, 32], strides = [1, 1]} : vector<2x96xf32> to vector<2x32xf32>
    %320 = arith.addf %318, %319 : vector<2x32xf32>
    %321 = arith.negf %320 : vector<2x32xf32>
    %322 = math.exp %321 : vector<2x32xf32>
    %cst_56 = arith.constant 1.000000e+00 : f32
    %323 = vector.broadcast %cst_56 : f32 to vector<2x32xf32>
    %324 = arith.addf %323, %322 : vector<2x32xf32>
    %325 = arith.divf %323, %324 : vector<2x32xf32>
    %326 = vector.extract_strided_slice %306 {offsets = [0, 64], sizes = [2, 32], strides = [1, 1]} : vector<2x96xf32> to vector<2x32xf32>
    %327 = vector.extract_strided_slice %309 {offsets = [0, 64], sizes = [2, 32], strides = [1, 1]} : vector<2x96xf32> to vector<2x32xf32>
    %328 = arith.mulf %317, %327 : vector<2x32xf32>
    %329 = arith.addf %326, %328 : vector<2x32xf32>
    %330 = math.tanh %329 : vector<2x32xf32>
    %cst_57 = arith.constant 1.000000e+00 : f32
    %331 = vector.broadcast %cst_57 : f32 to vector<2x32xf32>
    %332 = arith.subf %331, %325 : vector<2x32xf32>
    %333 = arith.mulf %332, %330 : vector<2x32xf32>
    %334 = arith.mulf %325, %302 : vector<2x32xf32>
    %335 = arith.addf %333, %334 : vector<2x32xf32>
    %336 = vector.extract_strided_slice %14 {offsets = [0, 7], sizes = [2, 1], strides = [1, 1]} : vector<2x8xf32> to vector<2x1xf32>
    %337 = vector.broadcast %336 : vector<2x1xf32> to vector<2x32xf32>
    %338 = arith.mulf %337, %335 : vector<2x32xf32>
    %cst_58 = arith.constant 1.000000e+00 : f32
    %339 = vector.broadcast %cst_58 : f32 to vector<2x1xf32>
    %340 = arith.subf %339, %336 : vector<2x1xf32>
    %341 = vector.broadcast %340 : vector<2x1xf32> to vector<2x32xf32>
    %342 = arith.mulf %341, %302 : vector<2x32xf32>
    %343 = arith.addf %338, %342 : vector<2x32xf32>
    %344 = vector.broadcast %336 : vector<2x1xf32> to vector<2x32xf32>
    %345 = arith.mulf %344, %335 : vector<2x32xf32>
    %c0_59 = arith.constant 0 : index
    %c0_60 = arith.constant 0 : index
    %346 = vector.load %arg19[%c0_59, %c0_60] : memref<2x32xf32, #tpu.memory_space<vmem>>, vector<2x32xf32>
    tpu.vector_store %arg19[%c0_59, %c0_60], %343 {strides = array<i32>} : memref<2x32xf32, #tpu.memory_space<vmem>>, vector<2x32xf32>,
    %347 = vector.shape_cast %58 : vector<2x32xf32> to vector<2x1x32xf32>
    %348 = vector.shape_cast %99 : vector<2x32xf32> to vector<2x1x32xf32>
    %349 = vector.shape_cast %140 : vector<2x32xf32> to vector<2x1x32xf32>
    %350 = vector.shape_cast %181 : vector<2x32xf32> to vector<2x1x32xf32>
    %351 = vector.shape_cast %222 : vector<2x32xf32> to vector<2x1x32xf32>
    %352 = vector.shape_cast %263 : vector<2x32xf32> to vector<2x1x32xf32>
    %353 = vector.shape_cast %304 : vector<2x32xf32> to vector<2x1x32xf32>
    %354 = vector.shape_cast %345 : vector<2x32xf32> to vector<2x1x32xf32>
    %355 = tpu.concatenate %347, %348, %349, %350, %351, %352, %353, %354 in 1 : vector<2x1x32xf32>, vector<2x1x32xf32>, vector<2x1x32xf32>, vector<2x1x32xf32>, vector<2x1x32xf32>, vector<2x1x32xf32>, vector<2x1x32xf32>, vector<2x1x32xf32> -> vector<2x8x32xf32>
    %356 = vector.shape_cast %355 : vector<2x8x32xf32> to vector<16x32xf32>
    %c0_61 = arith.constant 0 : index
    %c0_62 = arith.constant 0 : index
    %357 = vector.load %arg18[%c0_61, %c0_62] : memref<16x32xf32, #tpu.memory_space<vmem>>, vector<16x32xf32>
    tpu.vector_store %arg18[%c0_61, %c0_62], %356 {strides = array<i32>} : memref<16x32xf32, #tpu.memory_space<vmem>>, vector<16x32xf32>,
    %c0_63 = arith.constant 0 : index
    %c0_64 = arith.constant 0 : index
    %358 = vector.load %arg10[%c0_63, %c0_64] : memref<32x32xf32, #tpu.memory_space<vmem>>, vector<32x32xf32>
    %cst_65 = arith.constant dense<0.000000e+00> : vector<16x32xf32>
    %359 = tpu.matmul %356, %358, %cst_65 {dimension_numbers = #tpu.dot_dimension_numbers<[1], [0], [0], [1], [0, 0, 1, 1], [], []>} : vector<16x32xf32>, vector<32x32xf32>, vector<16x32xf32> -> vector<16x32xf32>
    %c0_66 = arith.constant 0 : index
    %c0_67 = arith.constant 0 : index
    %360 = vector.load %arg11[%c0_66, %c0_67] : memref<1x32xf32, #tpu.memory_space<vmem>>, vector<1x32xf32>
    %361 = vector.broadcast %360 : vector<1x32xf32> to vector<16x32xf32>
    %362 = arith.addf %359, %361 : vector<16x32xf32>
    %cst_68 = arith.constant 0.000000e+00 : f32
    %363 = vector.broadcast %cst_68 : f32 to vector<16x32xf32>
    %364 = arith.maximumf %362, %363 : vector<16x32xf32>
    %c0_69 = arith.constant 0 : index
    %c0_70 = arith.constant 0 : index
    %365 = vector.load %arg12[%c0_69, %c0_70] : memref<32x16xf32, #tpu.memory_space<vmem>>, vector<32x16xf32>
    %cst_71 = arith.constant dense<0.000000e+00> : vector<16x16xf32>
    %366 = tpu.matmul %364, %365, %cst_71 {dimension_numbers = #tpu.dot_dimension_numbers<[1], [0], [0], [1], [0, 0, 1, 1], [], []>} : vector<16x32xf32>, vector<32x16xf32>, vector<16x16xf32> -> vector<16x16xf32>
    %c0_72 = arith.constant 0 : index
    %c0_73 = arith.constant 0 : index
    %367 = vector.load %arg13[%c0_72, %c0_73] : memref<1x16xf32, #tpu.memory_space<vmem>>, vector<1x16xf32>
    %368 = vector.broadcast %367 : vector<1x16xf32> to vector<16x16xf32>
    %369 = arith.addf %366, %368 : vector<16x16xf32>
    %c0_74 = arith.constant 0 : index
    %c0_75 = arith.constant 0 : index
    %370 = vector.load %arg1[%c0_74, %c0_75] : memref<16x64xf32, #tpu.memory_space<vmem>>, vector<16x64xf32>
    %371 = tpu.concatenate %356, %370 in 1 : vector<16x32xf32>, vector<16x64xf32> -> vector<16x96xf32>
    %c0_76 = arith.constant 0 : index
    %c0_77 = arith.constant 0 : index
    %372 = vector.load %arg14[%c0_76, %c0_77] : memref<96x32xf32, #tpu.memory_space<vmem>>, vector<96x32xf32>
    %cst_78 = arith.constant dense<0.000000e+00> : vector<16x32xf32>
    %373 = tpu.matmul %371, %372, %cst_78 {dimension_numbers = #tpu.dot_dimension_numbers<[1], [0], [0], [1], [0, 0, 1, 1], [], []>} : vector<16x96xf32>, vector<96x32xf32>, vector<16x32xf32> -> vector<16x32xf32>
    %c0_79 = arith.constant 0 : index
    %c0_80 = arith.constant 0 : index
    %374 = vector.load %arg15[%c0_79, %c0_80] : memref<1x32xf32, #tpu.memory_space<vmem>>, vector<1x32xf32>
    %375 = vector.broadcast %374 : vector<1x32xf32> to vector<16x32xf32>
    %376 = arith.addf %373, %375 : vector<16x32xf32>
    %cst_81 = arith.constant 0.000000e+00 : f32
    %377 = vector.broadcast %cst_81 : f32 to vector<16x32xf32>
    %378 = arith.maximumf %376, %377 : vector<16x32xf32>
    %c0_82 = arith.constant 0 : index
    %c0_83 = arith.constant 0 : index
    %379 = vector.load %arg16[%c0_82, %c0_83] : memref<32x16xf32, #tpu.memory_space<vmem>>, vector<32x16xf32>
    %cst_84 = arith.constant dense<0.000000e+00> : vector<16x16xf32>
    %380 = tpu.matmul %378, %379, %cst_84 {dimension_numbers = #tpu.dot_dimension_numbers<[1], [0], [0], [1], [0, 0, 1, 1], [], []>} : vector<16x32xf32>, vector<32x16xf32>, vector<16x16xf32> -> vector<16x16xf32>
    %c0_85 = arith.constant 0 : index
    %c0_86 = arith.constant 0 : index
    %381 = vector.load %arg17[%c0_85, %c0_86] : memref<1x16xf32, #tpu.memory_space<vmem>>, vector<1x16xf32>
    %382 = vector.broadcast %381 : vector<1x16xf32> to vector<16x16xf32>
    %383 = arith.addf %380, %382 : vector<16x16xf32>
    %384 = tpu.concatenate %369, %383 in 1 : vector<16x16xf32>, vector<16x16xf32> -> vector<16x32xf32>
    %385 = tpu.iota {dimensions = array<i32: 1>} : vector<16x32xi32>
    %c8_i32 = arith.constant 8 : i32
    %386 = vector.broadcast %c8_i32 : i32 to vector<16x32xi32>
    %387 = arith.cmpi sge, %385, %386 : vector<16x32xi32>
    %c16_i32 = arith.constant 16 : i32
    %388 = vector.broadcast %c16_i32 : i32 to vector<16x32xi32>
    %389 = arith.cmpi slt, %385, %388 : vector<16x32xi32>
    %390 = arith.andi %387, %389 : vector<16x32xi1>
    %c24_i32 = arith.constant 24 : i32
    %391 = vector.broadcast %c24_i32 : i32 to vector<16x32xi32>
    %392 = arith.cmpi sge, %385, %391 : vector<16x32xi32>
    %393 = arith.ori %390, %392 : vector<16x32xi1>
    %cst_87 = arith.constant 0.000000e+00 : f32
    %394 = vector.broadcast %cst_87 : f32 to vector<16x32xf32>
    %395 = arith.maximumf %384, %394 : vector<16x32xf32>
    %396 = vector.broadcast %cst_87 : f32 to vector<16x32xf32>
    %397 = arith.subf %384, %396 : vector<16x32xf32>
    %398 = arith.cmpf one, %397, %397 : vector<16x32xf32>
    %399 = vector.broadcast %cst_87 : f32 to vector<16x32xf32>
    %400 = arith.addf %384, %399 : vector<16x32xf32>
    %401 = math.absf %397 : vector<16x32xf32>
    %cst_88 = arith.constant 0.000000e+00 : f32
    %402 = vector.broadcast %cst_88 : f32 to vector<16x32xf32>
    %403 = arith.subf %402, %401 : vector<16x32xf32>
    %404 = math.exp %403 : vector<16x32xf32>
    %405 = math.log1p %404 : vector<16x32xf32>
    %406 = arith.addf %395, %405 : vector<16x32xf32>
    %407 = arith.select %398, %400, %406 : vector<16x32xi1>, vector<16x32xf32>
    %cst_89 = arith.constant 1.000000e-01 : f32
    %408 = vector.broadcast %cst_89 : f32 to vector<16x32xf32>
    %409 = arith.addf %407, %408 : vector<16x32xf32>
    %410 = arith.select %393, %409, %384 : vector<16x32xi1>, vector<16x32xf32>
    %c0_90 = arith.constant 0 : index
    %c0_91 = arith.constant 0 : index
    %411 = vector.load %arg20[%c0_90, %c0_91] : memref<16x32xf32, #tpu.memory_space<vmem>>, vector<16x32xf32>
    tpu.vector_store %arg20[%c0_90, %c0_91], %410 {strides = array<i32>} : memref<16x32xf32, #tpu.memory_space<vmem>>, vector<16x32xf32>,
    return
  }
}

</mosaic_0001>

<llo_original>
// kernel: rssm_forward.1
$region0: #{rssm_forward.1}
  #allocation0 [shape = 'u32[]', space=smem, size = 0x4, offset = 0x4, fixed_abs, tag = 'smem constant byte address 0x4 - core index']
  #allocation1 [shape = 'u32[144,128]{1,0:T(1,128)}', space=vmem, size = 0x12000, scoped, tag = 'internal scratch']
  %s0 = inlined_call_operand.vmem [shape: f32[16,12], index: 0, kind: input, shape index: {}]
  %s1 = inlined_call_operand.vmem [shape: f32[16,64], index: 1, kind: input, shape index: {}]
  %s2 = inlined_call_operand.vmem [shape: f32[2,8], index: 2, kind: input, shape index: {}]
  %s3 = inlined_call_operand.vmem [shape: f32[2,32], index: 3, kind: input, shape index: {}]
  %s4 = inlined_call_operand.vmem [shape: f32[12,32], index: 4, kind: input, shape index: {}]
  %s5 = inlined_call_operand.vmem [shape: f32[1,32], index: 5, kind: input, shape index: {}]
  %s6 = inlined_call_operand.vmem [shape: f32[32,96], index: 6, kind: input, shape index: {}]
  %s7 = inlined_call_operand.vmem [shape: f32[1,96], index: 7, kind: input, shape index: {}]
  %s8 = inlined_call_operand.vmem [shape: f32[32,96], index: 8, kind: input, shape index: {}]
  %s9 = inlined_call_operand.vmem [shape: f32[1,96], index: 9, kind: input, shape index: {}]
  %s10 = inlined_call_operand.vmem [shape: f32[32,32], index: 10, kind: input, shape index: {}]
  %s11 = inlined_call_operand.vmem [shape: f32[1,32], index: 11, kind: input, shape index: {}]
  %s12 = inlined_call_operand.vmem [shape: f32[32,16], index: 12, kind: input, shape index: {}]
  %s13 = inlined_call_operand.vmem [shape: f32[1,16], index: 13, kind: input, shape index: {}]
  %s14 = inlined_call_operand.vmem [shape: f32[96,32], index: 14, kind: input, shape index: {}]
  %s15 = inlined_call_operand.vmem [shape: f32[1,32], index: 15, kind: input, shape index: {}]
  %s16 = inlined_call_operand.vmem [shape: f32[32,16], index: 16, kind: input, shape index: {}]
  %s17 = inlined_call_operand.vmem [shape: f32[1,16], index: 17, kind: input, shape index: {}]
  %s18 = inlined_call_operand.hbm [shape: f32[16,32], index: 18, kind: output, shape index: {0}]
  %s19 = inlined_call_operand.hbm [shape: f32[2,32], index: 19, kind: output, shape index: {1}]
  %s20 = inlined_call_operand.vmem [shape: f32[16,32], index: 20, kind: output, shape index: {2}]
  %21 = xla_tuple %s18, %s19, %s20
  %s22 = sld [smem:[#allocation0]]
  $region98: #{rssm_forward.1} parent=0
    _
  %s24 = ssub.s32 1, %s22
  %s25 = scalar_select 0, %s24, %s22
  $region1: #{rssm_forward.1} parent=0
    #allocation2 [shape = 'u8[8192]{0}', space=vmem, size = 0x2000, scoped, tag = 'output window, operand 0, single buffered']
    #allocation3 [shape = 's32[1]{0}', space=sflag, size = 0x4, scoped, tag = 'scoped memory for rssm_forward.1']
    #allocation4 [shape = 'u8[1024]{0}', space=vmem, size = 0x400, scoped, tag = 'output window, operand 1, single buffered']
    #allocation5 [shape = 's32[1]{0}', space=sflag, size = 0x4, scoped, tag = 'scoped memory for rssm_forward.1']
    %26 = vsyncpa [#allocation3], 0
    %27 = vsyncpa [#allocation5], 0
    // Predicated region
    $region2: #{rssm_forward.1} parent=1 // pred_check
      _
    $region3: #{rssm_forward.1} parent=1 // pred_check_branch
      %29 = sbr.rel (0) target = $region5
    $region4: #{rssm_forward.1} parent=1 // pred_region
      _
    $region5: #{rssm_forward.1} parent=1 // pred_fallthru
      _
    // Predicated region
    $region6: #{rssm_forward.1} parent=1 // pred_check
      _
    $region7: #{rssm_forward.1} parent=1 // pred_check_branch
      %31 = sbr.rel (0) target = $region9
    $region8: #{rssm_forward.1} parent=1 // pred_region
      _
    $region9: #{rssm_forward.1} parent=1 // pred_fallthru
      _
    // Predicated region
    $region10: #{rssm_forward.1} parent=1 // pred_check
      _
    $region11: #{rssm_forward.1} parent=1 // pred_check_branch
      %33 = sbr.rel (0) target = $region13
    $region12: #{rssm_forward.1} parent=1 // pred_region
      _
    $region13: #{rssm_forward.1} parent=1 // pred_fallthru
      _
    // Predicated region
    $region14: #{rssm_forward.1} parent=1 // pred_check
      _
    $region15: #{rssm_forward.1} parent=1 // pred_check_branch
      %35 = sbr.rel (0) target = $region17
    $region16: #{rssm_forward.1} parent=1 // pred_region
      _
    $region17: #{rssm_forward.1} parent=1 // pred_fallthru
      _
    // Predicated region
    $region18: #{rssm_forward.1} parent=1 // pred_check
      _
    $region19: #{rssm_forward.1} parent=1 // pred_check_branch
      %37 = sbr.rel (0) target = $region21
    $region20: #{rssm_forward.1} parent=1 // pred_region
      _
    $region21: #{rssm_forward.1} parent=1 // pred_fallthru
      _
    // Predicated region
    $region22: #{rssm_forward.1} parent=1 // pred_check
      _
    $region23: #{rssm_forward.1} parent=1 // pred_check_branch
      %39 = sbr.rel (0) target = $region25
    $region24: #{rssm_forward.1} parent=1 // pred_region
      _
    $region25: #{rssm_forward.1} parent=1 // pred_fallthru
      _
    // Predicated region
    $region26: #{rssm_forward.1} parent=1 // pred_check
      _
    $region27: #{rssm_forward.1} parent=1 // pred_check_branch
      %41 = sbr.rel (0) target = $region29
    $region28: #{rssm_forward.1} parent=1 // pred_region
      _
    $region29: #{rssm_forward.1} parent=1 // pred_fallthru
      _
    // Predicated region
    $region30: #{rssm_forward.1} parent=1 // pred_check
      _
    $region31: #{rssm_forward.1} parent=1 // pred_check_branch
      %43 = sbr.rel (0) target = $region33
    $region32: #{rssm_forward.1} parent=1 // pred_region
      _
    $region33: #{rssm_forward.1} parent=1 // pred_fallthru
      _
    // Predicated region
    $region34: #{rssm_forward.1} parent=1 // pred_check
      _
    $region35: #{rssm_forward.1} parent=1 // pred_check_branch
      %45 = sbr.rel (0) target = $region37
    $region36: #{rssm_forward.1} parent=1 // pred_region
      _
    $region37: #{rssm_forward.1} parent=1 // pred_fallthru
      _
    // Predicated region
    $region38: #{rssm_forward.1} parent=1 // pred_check
      _
    $region39: #{rssm_forward.1} parent=1 // pred_check_branch
      %47 = sbr.rel (0) target = $region41
    $region40: #{rssm_forward.1} parent=1 // pred_region
      _
    $region41: #{rssm_forward.1} parent=1 // pred_fallthru
      _
    // Predicated region
    $region42: #{rssm_forward.1} parent=1 // pred_check
      _
    $region43: #{rssm_forward.1} parent=1 // pred_check_branch
      %49 = sbr.rel (0) target = $region45
    $region44: #{rssm_forward.1} parent=1 // pred_region
      _
    $region45: #{rssm_forward.1} parent=1 // pred_fallthru
      _
    // Predicated region
    $region46: #{rssm_forward.1} parent=1 // pred_check
      _
    $region47: #{rssm_forward.1} parent=1 // pred_check_branch
      %51 = sbr.rel (0) target = $region49
    $region48: #{rssm_forward.1} parent=1 // pred_region
      _
    $region49: #{rssm_forward.1} parent=1 // pred_fallthru
      _
    // Predicated region
    $region50: #{rssm_forward.1} parent=1 // pred_check
      _
    $region51: #{rssm_forward.1} parent=1 // pred_check_branch
      %53 = sbr.rel (0) target = $region53
    $region52: #{rssm_forward.1} parent=1 // pred_region
      _
    $region53: #{rssm_forward.1} parent=1 // pred_fallthru
      _
    // Predicated region
    $region54: #{rssm_forward.1} parent=1 // pred_check
      _
    $region55: #{rssm_forward.1} parent=1 // pred_check_branch
      %55 = sbr.rel (0) target = $region57
    $region56: #{rssm_forward.1} parent=1 // pred_region
      _
    $region57: #{rssm_forward.1} parent=1 // pred_fallthru
      _
    // Predicated region
    $region58: #{rssm_forward.1} parent=1 // pred_check
      _
    $region59: #{rssm_forward.1} parent=1 // pred_check_branch
      %57 = sbr.rel (0) target = $region61
    $region60: #{rssm_forward.1} parent=1 // pred_region
      _
    $region61: #{rssm_forward.1} parent=1 // pred_fallthru
      _
    // Predicated region
    $region62: #{rssm_forward.1} parent=1 // pred_check
      _
    $region63: #{rssm_forward.1} parent=1 // pred_check_branch
      %59 = sbr.rel (0) target = $region65
    $region64: #{rssm_forward.1} parent=1 // pred_region
      _
    $region65: #{rssm_forward.1} parent=1 // pred_fallthru
      _
    // Predicated region
    $region66: #{rssm_forward.1} parent=1 // pred_check
      _
    $region67: #{rssm_forward.1} parent=1 // pred_check_branch
      %61 = sbr.rel (0) target = $region69
    $region68: #{rssm_forward.1} parent=1 // pred_region
      _
    $region69: #{rssm_forward.1} parent=1 // pred_fallthru
      _
    // Predicated region
    $region70: #{rssm_forward.1} parent=1 // pred_check
      _
    $region71: #{rssm_forward.1} parent=1 // pred_check_branch
      %63 = sbr.rel (0) target = $region73
    $region72: #{rssm_forward.1} parent=1 // pred_region
      _
    $region73: #{rssm_forward.1} parent=1 // pred_fallthru
      _
    %v64 = vld [vmem:[%s0] sm:$0xff]
    %v65 = vld [vmem:[%s0 + $0x8] sm:$0xff]
    %v66 = vld [vmem:[%s4] sm:$0xff]
    %v67 = vld [vmem:[%s4 + $0x8] sm:$0xf]
    %v68 = vld [vmem:[%s5] sm:$0x1]
    %v70 = vlaneseq
    %v71 = vshrl.u32 %v70, 7
    %v72 = vsub.s32 0, %v71
    %v73 = vrot.slane %v68, %v72
    %vm75 = vcmask 97280
    %v77 = vsel %vm75, %v64, 0
    %v80 = vsel %vm75, %v65, 0
    %vm82 = vcmask 1043456
    %v84 = vsel %vm82, %v67, 0
    %86 = vmatprep.subr.mxu0 0.0
    %87 = vmatpush1.msra.mxu0 %v66
    %88 = vmatprep.subr.mxu0 0.0
    %89 = vmatpush1.msra.mxu0 %v84
    %90 = vmatprep.subr.mxu0 0.0
    %91 = vmatpush1.msra.mxu0 0.0
    %92 = vmatprep.subr.mxu0 0.0
    %93 = vmatpush1.msra.mxu0 0.0
    %94 = vmatprep.subr.mxu0 0.0
    %95 = vmatpush1.msra.mxu0 0.0
    %96 = vmatprep.subr.mxu0 0.0
    %97 = vmatpush1.msra.mxu0 0.0
    %98 = vmatprep.subr.mxu0 0.0
    %99 = vmatpush1.msra.mxu0 0.0
    %100 = vmatprep.subr.mxu0 0.0
    %101 = vmatpush1.msra.mxu0 0.0
    %102 = vmatprep.subr.mxu0 0.0
    %103 = vmatpush1.msra.mxu0 0.0
    %104 = vmatprep.subr.mxu0 0.0
    %105 = vmatpush1.msra.mxu0 0.0
    %106 = vmatprep.subr.mxu0 0.0
    %107 = vmatpush1.msra.mxu0 0.0
    %108 = vmatprep.subr.mxu0 0.0
    %109 = vmatpush1.msra.mxu0 0.0
    %110 = vmatprep.subr.mxu0 0.0
    %111 = vmatpush1.msra.mxu0 0.0
    %112 = vmatprep.subr.mxu0 0.0
    %113 = vmatpush1.msra.mxu0 0.0
    %114 = vmatprep.subr.mxu0 0.0
    %115 = vmatpush1.msra.mxu0 0.0
    %116 = vmatprep.subr.mxu0 0.0
    %117 = vmatpush1.msra.mxu0 0.0
    %118 = vmatprep.subr.mxu0 0.0
    %119 = vmatpush1.msra.mxu0 0.0
    %120 = vmatprep.subr.mxu0 0.0
    %121 = vmatpush1.msra.mxu0 0.0
    %122 = vmatprep.subr.mxu0 0.0
    %123 = vmatpush1.msra.mxu0 0.0
    %124 = vmatprep.subr.mxu0 0.0
    %125 = vmatpush1.msra.mxu0 0.0
    %126 = vmatprep.subr.mxu0 0.0
    %127 = vmatpush1.msra.mxu0 0.0
    %128 = vmatprep.subr.mxu0 0.0
    %129 = vmatpush1.msra.mxu0 0.0
    %130 = vmatprep.subr.mxu0 0.0
    %131 = vmatpush1.msra.mxu0 0.0
    %132 = vmatprep.subr.mxu0 0.0
    %133 = vmatpush1.msra.mxu0 0.0
    %134 = vmatprep.subr.mxu0 0.0
    %135 = vmatpush1.msra.mxu0 0.0
    %136 = vmatprep.subr.mxu0 0.0
    %137 = vmatpush1.msra.mxu0 0.0
    %138 = vmatprep.subr.mxu0 0.0
    %139 = vmatpush1.msra.mxu0 0.0
    %140 = vmatprep.subr.mxu0 0.0
    %141 = vmatpush1.msra.mxu0 0.0
    %142 = vmatprep.subr.mxu0 0.0
    %143 = vmatpush1.msra.mxu0 0.0
    %144 = vmatprep.subr.mxu0 0.0
    %145 = vmatpush1.msra.mxu0 0.0
    %146 = vmatprep.subr.mxu0 0.0
    %147 = vmatpush1.msra.mxu0 0.0
    %148 = vmatprep.subr.mxu0 0.0
    %149 = vmatpush1.msra.mxu0 0.0
    %150 = vmatprep.mubr.f32.mxu0 0.0
    %151 = vmatmul.mubr.f32.gmra.mrb[0].mxu0 %v77
    %v152 = vpop.f32.mrb[0].mxu0
    %v153 = vadd.f32 %v73, %v152
    %v154 = vpop.f32.mrb[0].mxu0
    %155 = vmatprep.mubr.f32.mxu0 0.0
    %156 = vmatmul.mubr.f32.gmra.mrb[0].mxu0 %v80
    %v157 = vpop.f32.mrb[0].mxu0
    %v158 = vadd.f32 %v73, %v157
    %v159 = vpop.f32.mrb[0].mxu0
    %160 = vdwg.mxu0
    %v161 = vmax.f32 %v153, 0.0
    %v162 = vmax.f32 %v158, 0.0
    %v163 = vld [vmem:[%s6] sm:$0xff]
    %v164 = vld [vmem:[%s6 + $0x8] sm:$0xff]
    %v165 = vld [vmem:[%s6 + $0x10] sm:$0xff]
    %v166 = vld [vmem:[%s6 + $0x18] sm:$0xff]
    %v167 = vld [vmem:[%s7] sm:$0x1]
    %v169 = vlaneseq
    %v170 = vshrl.u32 %v169, 7
    %v171 = vsub.s32 0, %v170
    %v172 = vrot.slane %v167, %v171
    %vm174 = vcmask 261120
    %v176 = vsel %vm174, %v161, 0
    %v179 = vsel %vm174, %v162, 0
    %181 = vmatprep.subr.mxu0 0.0
    %182 = vmatpush1.msra.mxu0 %v163
    %183 = vmatprep.subr.mxu0 0.0
    %184 = vmatpush1.msra.mxu0 %v164
    %185 = vmatprep.subr.mxu0 0.0
    %186 = vmatpush1.msra.mxu0 %v165
    %187 = vmatprep.subr.mxu0 0.0
    %188 = vmatpush1.msra.mxu0 %v166
    %189 = vmatprep.subr.mxu0 0.0
    %190 = vmatpush1.msra.mxu0 0.0
    %191 = vmatprep.subr.mxu0 0.0
    %192 = vmatpush1.msra.mxu0 0.0
    %193 = vmatprep.subr.mxu0 0.0
    %194 = vmatpush1.msra.mxu0 0.0
    %195 = vmatprep.subr.mxu0 0.0
    %196 = vmatpush1.msra.mxu0 0.0
    %197 = vmatprep.subr.mxu0 0.0
    %198 = vmatpush1.msra.mxu0 0.0
    %199 = vmatprep.subr.mxu0 0.0
    %200 = vmatpush1.msra.mxu0 0.0
    %201 = vmatprep.subr.mxu0 0.0
    %202 = vmatpush1.msra.mxu0 0.0
    %203 = vmatprep.subr.mxu0 0.0
    %204 = vmatpush1.msra.mxu0 0.0
    %205 = vmatprep.subr.mxu0 0.0
    %206 = vmatpush1.msra.mxu0 0.0
    %207 = vmatprep.subr.mxu0 0.0
    %208 = vmatpush1.msra.mxu0 0.0
    %209 = vmatprep.subr.mxu0 0.0
    %210 = vmatpush1.msra.mxu0 0.0
    %211 = vmatprep.subr.mxu0 0.0
    %212 = vmatpush1.msra.mxu0 0.0
    %213 = vmatprep.subr.mxu0 0.0
    %214 = vmatpush1.msra.mxu0 0.0
    %215 = vmatprep.subr.mxu0 0.0
    %216 = vmatpush1.msra.mxu0 0.0
    %217 = vmatprep.subr.mxu0 0.0
    %218 = vmatpush1.msra.mxu0 0.0
    %219 = vmatprep.subr.mxu0 0.0
    %220 = vmatpush1.msra.mxu0 0.0
    %221 = vmatprep.subr.mxu0 0.0
    %222 = vmatpush1.msra.mxu0 0.0
    %223 = vmatprep.subr.mxu0 0.0
    %224 = vmatpush1.msra.mxu0 0.0
    %225 = vmatprep.subr.mxu0 0.0
    %226 = vmatpush1.msra.mxu0 0.0
    %227 = vmatprep.subr.mxu0 0.0
    %228 = vmatpush1.msra.mxu0 0.0
    %229 = vmatprep.subr.mxu0 0.0
    %230 = vmatpush1.msra.mxu0 0.0
    %231 = vmatprep.subr.mxu0 0.0
    %232 = vmatpush1.msra.mxu0 0.0
    %233 = vmatprep.subr.mxu0 0.0
    %234 = vmatpush1.msra.mxu0 0.0
    %235 = vmatprep.subr.mxu0 0.0
    %236 = vmatpush1.msra.mxu0 0.0
    %237 = vmatprep.subr.mxu0 0.0
    %238 = vmatpush1.msra.mxu0 0.0
    %239 = vmatprep.subr.mxu0 0.0
    %240 = vmatpush1.msra.mxu0 0.0
    %241 = vmatprep.subr.mxu0 0.0
    %242 = vmatpush1.msra.mxu0 0.0
    %243 = vmatprep.subr.mxu0 0.0
    %244 = vmatpush1.msra.mxu0 0.0
    %245 = vmatprep.mubr.f32.mxu0 0.0
    %246 = vmatmul.mubr.f32.gmra.mrb[0].mxu0 %v176
    %v247 = vpop.f32.mrb[0].mxu0
    %v248 = vadd.f32 %v172, %v247
    %v249 = vpop.f32.mrb[0].mxu0
    %250 = vmatprep.mubr.f32.mxu0 0.0
    %251 = vmatmul.mubr.f32.gmra.mrb[0].mxu0 %v179
    %v252 = vpop.f32.mrb[0].mxu0
    %v253 = vadd.f32 %v172, %v252
    %v254 = vpop.f32.mrb[0].mxu0
    %255 = vdwg.mxu0
    %v256 = vld [vmem:[%s2] sm:$0x3]
    %v257 = vld [vmem:[%s8] sm:$0xff]
    %v258 = vld [vmem:[%s8 + $0x8] sm:$0xff]
    %v259 = vld [vmem:[%s8 + $0x10] sm:$0xff]
    %v260 = vld [vmem:[%s8 + $0x18] sm:$0xff]
    %v261 = vld [vmem:[%s9] sm:$0x1]
    %v262 = vld [vmem:[%s3] sm:$0x3]
    %v264 = vlaneseq
    %v265 = vshrl.u32 %v264, 7
    %v266 = vsub.s32 0, %v265
    %v267 = vrot.slane %v261, %v266
    %v270 = vsel %vm174, %v262, 0
    %272 = vmatprep.subr.mxu0 0.0
    %273 = vmatpush1.msra.mxu0 %v257
    %274 = vmatprep.subr.mxu0 0.0
    %275 = vmatpush1.msra.mxu0 %v258
    %276 = vmatprep.subr.mxu0 0.0
    %277 = vmatpush1.msra.mxu0 %v259
    %278 = vmatprep.subr.mxu0 0.0
    %279 = vmatpush1.msra.mxu0 %v260
    %280 = vmatprep.subr.mxu0 0.0
    %281 = vmatpush1.msra.mxu0 0.0
    %282 = vmatprep.subr.mxu0 0.0
    %283 = vmatpush1.msra.mxu0 0.0
    %284 = vmatprep.subr.mxu0 0.0
    %285 = vmatpush1.msra.mxu0 0.0
    %286 = vmatprep.subr.mxu0 0.0
    %287 = vmatpush1.msra.mxu0 0.0
    %288 = vmatprep.subr.mxu0 0.0
    %289 = vmatpush1.msra.mxu0 0.0
    %290 = vmatprep.subr.mxu0 0.0
    %291 = vmatpush1.msra.mxu0 0.0
    %292 = vmatprep.subr.mxu0 0.0
    %293 = vmatpush1.msra.mxu0 0.0
    %294 = vmatprep.subr.mxu0 0.0
    %295 = vmatpush1.msra.mxu0 0.0
    %296 = vmatprep.subr.mxu0 0.0
    %297 = vmatpush1.msra.mxu0 0.0
    %298 = vmatprep.subr.mxu0 0.0
    %299 = vmatpush1.msra.mxu0 0.0
    %300 = vmatprep.subr.mxu0 0.0
    %301 = vmatpush1.msra.mxu0 0.0
    %302 = vmatprep.subr.mxu0 0.0
    %303 = vmatpush1.msra.mxu0 0.0
    %304 = vmatprep.subr.mxu0 0.0
    %305 = vmatpush1.msra.mxu0 0.0
    %306 = vmatprep.subr.mxu0 0.0
    %307 = vmatpush1.msra.mxu0 0.0
    %308 = vmatprep.subr.mxu0 0.0
    %309 = vmatpush1.msra.mxu0 0.0
    %310 = vmatprep.subr.mxu0 0.0
    %311 = vmatpush1.msra.mxu0 0.0
    %312 = vmatprep.subr.mxu0 0.0
    %313 = vmatpush1.msra.mxu0 0.0
    %314 = vmatprep.subr.mxu0 0.0
    %315 = vmatpush1.msra.mxu0 0.0
    %316 = vmatprep.subr.mxu0 0.0
    %317 = vmatpush1.msra.mxu0 0.0
    %318 = vmatprep.subr.mxu0 0.0
    %319 = vmatpush1.msra.mxu0 0.0
    %320 = vmatprep.subr.mxu0 0.0
    %321 = vmatpush1.msra.mxu0 0.0
    %322 = vmatprep.subr.mxu0 0.0
    %323 = vmatpush1.msra.mxu0 0.0
    %324 = vmatprep.subr.mxu0 0.0
    %325 = vmatpush1.msra.mxu0 0.0
    %326 = vmatprep.subr.mxu0 0.0
    %327 = vmatpush1.msra.mxu0 0.0
    %328 = vmatprep.subr.mxu0 0.0
    %329 = vmatpush1.msra.mxu0 0.0
    %330 = vmatprep.subr.mxu0 0.0
    %331 = vmatpush1.msra.mxu0 0.0
    %332 = vmatprep.subr.mxu0 0.0
    %333 = vmatpush1.msra.mxu0 0.0
    %334 = vmatprep.subr.mxu0 0.0
    %335 = vmatpush1.msra.mxu0 0.0
    %336 = vmatprep.mubr.f32.mxu0 0.0
    %337 = vmatmul.mubr.f32.gmra.mrb[0].mxu0 %v270
    %v338 = vpop.f32.mrb[0].mxu0
    %v339 = vadd.f32 %v267, %v338
    %v340 = vpop.f32.mrb[0].mxu0
    %341 = vdwg.mxu0
    %v343 = vrot.slane %v339, 1
    %v346 = vadd.f32 %v248, %v339
    %v347 = vadd.f32 %v253, %v343
    %v348 = vxor.u32 %v346, 2147483648
    %v349 = vxor.u32 %v347, 2147483648
    %v350 = vmul.f32 %v348, 1.442695
    %v351 = vpow.pop %v350
    %v352 = vmul.f32 %v349, 1.442695
    %v353 = vpow.pop %v352
    %v354 = vadd.f32 %v351, 1.0
    %v355 = vadd.f32 %v353, 1.0
    %v356 = vrcp.pop %v354
    %v357 = vmul.f32 1.0, %v356
    %v358 = vrcp.pop %v355
    %v359 = vmul.f32 1.0, %v358
    %360 = vrot.lane.b32.xlu0 %v339, 64
    %v361 = vpop.permute.xlu0 %360
    %362 = vrot.lane.b32.xlu0 %v343, 64
    %v363 = vpop.permute.xlu0 %362
    %v366 = vmul.f32 %v357, %v361
    %v367 = vmul.f32 %v359, %v363
    %370 = vrot.lane.b32.xlu0 %v366, 64
    %v371 = vpop.permute.xlu0 %370
    %372 = vrot.lane.b32.xlu0 %v367, 64
    %v373 = vpop.permute.xlu0 %372
    %v376 = vadd.f32 %v248, %v371
    %v377 = vadd.f32 %v253, %v373
    %v378 = vtanh.pop %v376
    %v379 = vtanh.pop %v377
    %v380 = vsub.f32 1.0, %v357
    %v381 = vsub.f32 1.0, %v359
    %384 = vrot.lane.b32.xlu0 %v378, 96
    %v385 = vpop.permute.xlu0 %384
    %386 = vrot.lane.b32.xlu0 %v379, 96
    %v387 = vpop.permute.xlu0 %386
    %v390 = vmul.f32 %v380, %v385
    %v391 = vmul.f32 %v381, %v387
    %v392 = vrot.slane %v262, 1
    %393 = vrot.lane.b32.xlu0 %v262, 32
    %v394 = vpop.permute.xlu0 %393
    %395 = vrot.lane.b32.xlu0 %v392, 32
    %v396 = vpop.permute.xlu0 %395
    %v399 = vmul.f32 %v357, %v394
    %v400 = vmul.f32 %v359, %v396
    %v401 = vadd.f32 %v390, %v399
    %v402 = vadd.f32 %v391, %v400
    %404 = vset.pattern.permute.xlu0 0
    %405 = vperm.xlu0 %404, %v256
    %v406 = vpop.permute.xlu0 %405
    %v410 = vrot.slane %v402, 7
    %vm411 = vcmask 1041409
    %v412 = vsel %vm411, %v410, %v401
    %413 = vrot.lane.b32.xlu0 %v412, 96
    %v414 = vpop.permute.xlu0 %413
    %v416 = vmul.f32 %v406, %v414
    %v417 = vsub.f32 1.0, %v256
    %419 = vset.pattern.permute.xlu0 0
    %420 = vperm.xlu0 %419, %v417
    %v421 = vpop.permute.xlu0 %420
    %v423 = vmul.f32 %v421, %v262
    %v424 = vadd.f32 %v416, %v423
    %v426 = vsel %vm174, %v424, 0
    %428 = vmatprep.subr.mxu0 0.0
    %429 = vmatpush1.msra.mxu0 %v257
    %430 = vmatprep.subr.mxu0 0.0
    %431 = vmatpush1.msra.mxu0 %v258
    %432 = vmatprep.subr.mxu0 0.0
    %433 = vmatpush1.msra.mxu0 %v259
    %434 = vmatprep.subr.mxu0 0.0
    %435 = vmatpush1.msra.mxu0 %v260
    %436 = vmatprep.subr.mxu0 0.0
    %437 = vmatpush1.msra.mxu0 0.0
    %438 = vmatprep.subr.mxu0 0.0
    %439 = vmatpush1.msra.mxu0 0.0
    %440 = vmatprep.subr.mxu0 0.0
    %441 = vmatpush1.msra.mxu0 0.0
    %442 = vmatprep.subr.mxu0 0.0
    %443 = vmatpush1.msra.mxu0 0.0
    %444 = vmatprep.subr.mxu0 0.0
    %445 = vmatpush1.msra.mxu0 0.0
    %446 = vmatprep.subr.mxu0 0.0
    %447 = vmatpush1.msra.mxu0 0.0
    %448 = vmatprep.subr.mxu0 0.0
    %449 = vmatpush1.msra.mxu0 0.0
    %450 = vmatprep.subr.mxu0 0.0
    %451 = vmatpush1.msra.mxu0 0.0
    %452 = vmatprep.subr.mxu0 0.0
    %453 = vmatpush1.msra.mxu0 0.0
    %454 = vmatprep.subr.mxu0 0.0
    %455 = vmatpush1.msra.mxu0 0.0
    %456 = vmatprep.subr.mxu0 0.0
    %457 = vmatpush1.msra.mxu0 0.0
    %458 = vmatprep.subr.mxu0 0.0
    %459 = vmatpush1.msra.mxu0 0.0
    %460 = vmatprep.subr.mxu0 0.0
    %461 = vmatpush1.msra.mxu0 0.0
    %462 = vmatprep.subr.mxu0 0.0
    %463 = vmatpush1.msra.mxu0 0.0
    %464 = vmatprep.subr.mxu0 0.0
    %465 = vmatpush1.msra.mxu0 0.0
    %466 = vmatprep.subr.mxu0 0.0
    %467 = vmatpush1.msra.mxu0 0.0
    %468 = vmatprep.subr.mxu0 0.0
    %469 = vmatpush1.msra.mxu0 0.0
    %470 = vmatprep.subr.mxu0 0.0
    %471 = vmatpush1.msra.mxu0 0.0
    %472 = vmatprep.subr.mxu0 0.0
    %473 = vmatpush1.msra.mxu0 0.0
    %474 = vmatprep.subr.mxu0 0.0
    %475 = vmatpush1.msra.mxu0 0.0
    %476 = vmatprep.subr.mxu0 0.0
    %477 = vmatpush1.msra.mxu0 0.0
    %478 = vmatprep.subr.mxu0 0.0
    %479 = vmatpush1.msra.mxu0 0.0
    %480 = vmatprep.subr.mxu0 0.0
    %481 = vmatpush1.msra.mxu0 0.0
    %482 = vmatprep.subr.mxu0 0.0
    %483 = vmatpush1.msra.mxu0 0.0
    %484 = vmatprep.subr.mxu0 0.0
    %485 = vmatpush1.msra.mxu0 0.0
    %486 = vmatprep.subr.mxu0 0.0
    %487 = vmatpush1.msra.mxu0 0.0
    %488 = vmatprep.subr.mxu0 0.0
    %489 = vmatpush1.msra.mxu0 0.0
    %490 = vmatprep.subr.mxu0 0.0
    %491 = vmatpush1.msra.mxu0 0.0
    %492 = vmatprep.mubr.f32.mxu0 0.0
    %493 = vmatmul.mubr.f32.gmra.mrb[0].mxu0 %v426
    %v494 = vpop.f32.mrb[0].mxu0
    %v495 = vadd.f32 %v267, %v494
    %v496 = vpop.f32.mrb[0].mxu0
    %497 = vdwg.mxu0
    %v499 = vrot.slane %v495, 7
    %v502 = vadd.f32 %v248, %v499
    %v503 = vadd.f32 %v253, %v495
    %v504 = vxor.u32 %v502, 2147483648
    %v505 = vxor.u32 %v503, 2147483648
    %v506 = vmul.f32 %v504, 1.442695
    %v507 = vpow.pop %v506
    %v508 = vmul.f32 %v505, 1.442695
    %v509 = vpow.pop %v508
    %v510 = vadd.f32 %v507, 1.0
    %v511 = vadd.f32 %v509, 1.0
    %v512 = vrcp.pop %v510
    %v513 = vmul.f32 1.0, %v512
    %v514 = vrcp.pop %v511
    %v515 = vmul.f32 1.0, %v514
    %516 = vrot.lane.b32.xlu0 %v499, 64
    %v517 = vpop.permute.xlu0 %516
    %518 = vrot.lane.b32.xlu0 %v495, 64
    %v519 = vpop.permute.xlu0 %518
    %v522 = vmul.f32 %v513, %v517
    %v523 = vmul.f32 %v515, %v519
    %526 = vrot.lane.b32.xlu0 %v522, 64
    %v527 = vpop.permute.xlu0 %526
    %528 = vrot.lane.b32.xlu0 %v523, 64
    %v529 = vpop.permute.xlu0 %528
    %v532 = vadd.f32 %v248, %v527
    %v533 = vadd.f32 %v253, %v529
    %v534 = vtanh.pop %v532
    %v535 = vtanh.pop %v533
    %v536 = vsub.f32 1.0, %v513
    %v537 = vsub.f32 1.0, %v515
    %540 = vrot.lane.b32.xlu0 %v534, 96
    %v541 = vpop.permute.xlu0 %540
    %542 = vrot.lane.b32.xlu0 %v535, 96
    %v543 = vpop.permute.xlu0 %542
    %v546 = vmul.f32 %v536, %v541
    %v547 = vmul.f32 %v537, %v543
    %v548 = vrot.slane %v424, 7
    %549 = vrot.lane.b32.xlu0 %v548, 32
    %v550 = vpop.permute.xlu0 %549
    %551 = vrot.lane.b32.xlu0 %v424, 32
    %v552 = vpop.permute.xlu0 %551
    %v555 = vmul.f32 %v513, %v550
    %v556 = vmul.f32 %v515, %v552
    %v557 = vadd.f32 %v546, %v555
    %v558 = vadd.f32 %v547, %v556
    %559 = vset.pattern.permute.xlu0 1
    %560 = vperm.xlu0 %559, %v256
    %v561 = vpop.permute.xlu0 %560
    %v565 = vrot.slane %v557, 1
    %v566 = vsel %vm411, %v558, %v565
    %567 = vrot.lane.b32.xlu0 %v566, 96
    %v568 = vpop.permute.xlu0 %567
    %v570 = vmul.f32 %v561, %v568
    %571 = vset.pattern.permute.xlu0 1
    %572 = vperm.xlu0 %571, %v417
    %v573 = vpop.permute.xlu0 %572
    %v575 = vmul.f32 %v573, %v424
    %v576 = vadd.f32 %v570, %v575
    %v578 = vsel %vm174, %v576, 0
    %580 = vmatprep.subr.mxu0 0.0
    %581 = vmatpush1.msra.mxu0 %v257
    %582 = vmatprep.subr.mxu0 0.0
    %583 = vmatpush1.msra.mxu0 %v258
    %584 = vmatprep.subr.mxu0 0.0
    %585 = vmatpush1.msra.mxu0 %v259
    %586 = vmatprep.subr.mxu0 0.0
    %587 = vmatpush1.msra.mxu0 %v260
    %588 = vmatprep.subr.mxu0 0.0
    %589 = vmatpush1.msra.mxu0 0.0
    %590 = vmatprep.subr.mxu0 0.0
    %591 = vmatpush1.msra.mxu0 0.0
    %592 = vmatprep.subr.mxu0 0.0
    %593 = vmatpush1.msra.mxu0 0.0
    %594 = vmatprep.subr.mxu0 0.0
    %595 = vmatpush1.msra.mxu0 0.0
    %596 = vmatprep.subr.mxu0 0.0
    %597 = vmatpush1.msra.mxu0 0.0
    %598 = vmatprep.subr.mxu0 0.0
    %599 = vmatpush1.msra.mxu0 0.0
    %600 = vmatprep.subr.mxu0 0.0
    %601 = vmatpush1.msra.mxu0 0.0
    %602 = vmatprep.subr.mxu0 0.0
    %603 = vmatpush1.msra.mxu0 0.0
    %604 = vmatprep.subr.mxu0 0.0
    %605 = vmatpush1.msra.mxu0 0.0
    %606 = vmatprep.subr.mxu0 0.0
    %607 = vmatpush1.msra.mxu0 0.0
    %608 = vmatprep.subr.mxu0 0.0
    %609 = vmatpush1.msra.mxu0 0.0
    %610 = vmatprep.subr.mxu0 0.0
    %611 = vmatpush1.msra.mxu0 0.0
    %612 = vmatprep.subr.mxu0 0.0
    %613 = vmatpush1.msra.mxu0 0.0
    %614 = vmatprep.subr.mxu0 0.0
    %615 = vmatpush1.msra.mxu0 0.0
    %616 = vmatprep.subr.mxu0 0.0
    %617 = vmatpush1.msra.mxu0 0.0
    %618 = vmatprep.subr.mxu0 0.0
    %619 = vmatpush1.msra.mxu0 0.0
    %620 = vmatprep.subr.mxu0 0.0
    %621 = vmatpush1.msra.mxu0 0.0
    %622 = vmatprep.subr.mxu0 0.0
    %623 = vmatpush1.msra.mxu0 0.0
    %624 = vmatprep.subr.mxu0 0.0
    %625 = vmatpush1.msra.mxu0 0.0
    %626 = vmatprep.subr.mxu0 0.0
    %627 = vmatpush1.msra.mxu0 0.0
    %628 = vmatprep.subr.mxu0 0.0
    %629 = vmatpush1.msra.mxu0 0.0
    %630 = vmatprep.subr.mxu0 0.0
    %631 = vmatpush1.msra.mxu0 0.0
    %632 = vmatprep.subr.mxu0 0.0
    %633 = vmatpush1.msra.mxu0 0.0
    %634 = vmatprep.subr.mxu0 0.0
    %635 = vmatpush1.msra.mxu0 0.0
    %636 = vmatprep.subr.mxu0 0.0
    %637 = vmatpush1.msra.mxu0 0.0
    %638 = vmatprep.subr.mxu0 0.0
    %639 = vmatpush1.msra.mxu0 0.0
    %640 = vmatprep.subr.mxu0 0.0
    %641 = vmatpush1.msra.mxu0 0.0
    %642 = vmatprep.subr.mxu0 0.0
    %643 = vmatpush1.msra.mxu0 0.0
    %644 = vmatprep.mubr.f32.mxu0 0.0
    %645 = vmatmul.mubr.f32.gmra.mrb[0].mxu0 %v578
    %v646 = vpop.f32.mrb[0].mxu0
    %v647 = vadd.f32 %v267, %v646
    %v648 = vpop.f32.mrb[0].mxu0
    %649 = vdwg.mxu0
    %v651 = vrot.slane %v647, 6
    %v652 = vrot.slane %v647, 7
    %v655 = vadd.f32 %v248, %v651
    %v656 = vadd.f32 %v253, %v652
    %v657 = vxor.u32 %v655, 2147483648
    %v658 = vxor.u32 %v656, 2147483648
    %v659 = vmul.f32 %v657, 1.442695
    %v660 = vpow.pop %v659
    %v661 = vmul.f32 %v658, 1.442695
    %v662 = vpow.pop %v661
    %v663 = vadd.f32 %v660, 1.0
    %v664 = vadd.f32 %v662, 1.0
    %v665 = vrcp.pop %v663
    %v666 = vmul.f32 1.0, %v665
    %v667 = vrcp.pop %v664
    %v668 = vmul.f32 1.0, %v667
    %669 = vrot.lane.b32.xlu0 %v651, 64
    %v670 = vpop.permute.xlu0 %669
    %671 = vrot.lane.b32.xlu0 %v652, 64
    %v672 = vpop.permute.xlu0 %671
    %v675 = vmul.f32 %v666, %v670
    %v676 = vmul.f32 %v668, %v672
    %679 = vrot.lane.b32.xlu0 %v675, 64
    %v680 = vpop.permute.xlu0 %679
    %681 = vrot.lane.b32.xlu0 %v676, 64
    %v682 = vpop.permute.xlu0 %681
    %v685 = vadd.f32 %v248, %v680
    %v686 = vadd.f32 %v253, %v682
    %v687 = vtanh.pop %v685
    %v688 = vtanh.pop %v686
    %v689 = vsub.f32 1.0, %v666
    %v690 = vsub.f32 1.0, %v668
    %693 = vrot.lane.b32.xlu0 %v687, 96
    %v694 = vpop.permute.xlu0 %693
    %695 = vrot.lane.b32.xlu0 %v688, 96
    %v696 = vpop.permute.xlu0 %695
    %v699 = vmul.f32 %v689, %v694
    %v700 = vmul.f32 %v690, %v696
    %v701 = vrot.slane %v576, 6
    %v702 = vrot.slane %v576, 7
    %703 = vrot.lane.b32.xlu0 %v701, 32
    %v704 = vpop.permute.xlu0 %703
    %705 = vrot.lane.b32.xlu0 %v702, 32
    %v706 = vpop.permute.xlu0 %705
    %v709 = vmul.f32 %v666, %v704
    %v710 = vmul.f32 %v668, %v706
    %v711 = vadd.f32 %v699, %v709
    %v712 = vadd.f32 %v700, %v710
    %713 = vset.pattern.permute.xlu0 2
    %714 = vperm.xlu0 %713, %v256
    %v715 = vpop.permute.xlu0 %714
    %v719 = vrot.slane %v711, 2
    %v720 = vrot.slane %v712, 1
    %v721 = vsel %vm411, %v720, %v719
    %722 = vrot.lane.b32.xlu0 %v721, 96
    %v723 = vpop.permute.xlu0 %722
    %v725 = vmul.f32 %v715, %v723
    %726 = vset.pattern.permute.xlu0 2
    %727 = vperm.xlu0 %726, %v417
    %v728 = vpop.permute.xlu0 %727
    %v730 = vmul.f32 %v728, %v576
    %v731 = vadd.f32 %v725, %v730
    %v733 = vsel %vm174, %v731, 0
    %735 = vmatprep.subr.mxu0 0.0
    %736 = vmatpush1.msra.mxu0 %v257
    %737 = vmatprep.subr.mxu0 0.0
    %738 = vmatpush1.msra.mxu0 %v258
    %739 = vmatprep.subr.mxu0 0.0
    %740 = vmatpush1.msra.mxu0 %v259
    %741 = vmatprep.subr.mxu0 0.0
    %742 = vmatpush1.msra.mxu0 %v260
    %743 = vmatprep.subr.mxu0 0.0
    %744 = vmatpush1.msra.mxu0 0.0
    %745 = vmatprep.subr.mxu0 0.0
    %746 = vmatpush1.msra.mxu0 0.0
    %747 = vmatprep.subr.mxu0 0.0
    %748 = vmatpush1.msra.mxu0 0.0
    %749 = vmatprep.subr.mxu0 0.0
    %750 = vmatpush1.msra.mxu0 0.0
    %751 = vmatprep.subr.mxu0 0.0
    %752 = vmatpush1.msra.mxu0 0.0
    %753 = vmatprep.subr.mxu0 0.0
    %754 = vmatpush1.msra.mxu0 0.0
    %755 = vmatprep.subr.mxu0 0.0
    %756 = vmatpush1.msra.mxu0 0.0
    %757 = vmatprep.subr.mxu0 0.0
    %758 = vmatpush1.msra.mxu0 0.0
    %759 = vmatprep.subr.mxu0 0.0
    %760 = vmatpush1.msra.mxu0 0.0
    %761 = vmatprep.subr.mxu0 0.0
    %762 = vmatpush1.msra.mxu0 0.0
    %763 = vmatprep.subr.mxu0 0.0
    %764 = vmatpush1.msra.mxu0 0.0
    %765 = vmatprep.subr.mxu0 0.0
    %766 = vmatpush1.msra.mxu0 0.0
    %767 = vmatprep.subr.mxu0 0.0
    %768 = vmatpush1.msra.mxu0 0.0
    %769 = vmatprep.subr.mxu0 0.0
    %770 = vmatpush1.msra.mxu0 0.0
    %771 = vmatprep.subr.mxu0 0.0
    %772 = vmatpush1.msra.mxu0 0.0
    %773 = vmatprep.subr.mxu0 0.0
    %774 = vmatpush1.msra.mxu0 0.0
    %775 = vmatprep.subr.mxu0 0.0
    %776 = vmatpush1.msra.mxu0 0.0
    %777 = vmatprep.subr.mxu0 0.0
    %778 = vmatpush1.msra.mxu0 0.0
    %779 = vmatprep.subr.mxu0 0.0
    %780 = vmatpush1.msra.mxu0 0.0
    %781 = vmatprep.subr.mxu0 0.0
    %782 = vmatpush1.msra.mxu0 0.0
    %783 = vmatprep.subr.mxu0 0.0
    %784 = vmatpush1.msra.mxu0 0.0
    %785 = vmatprep.subr.mxu0 0.0
    %786 = vmatpush1.msra.mxu0 0.0
    %787 = vmatprep.subr.mxu0 0.0
    %788 = vmatpush1.msra.mxu0 0.0
    %789 = vmatprep.subr.mxu0 0.0
    %790 = vmatpush1.msra.mxu0 0.0
    %791 = vmatprep.subr.mxu0 0.0
    %792 = vmatpush1.msra.mxu0 0.0
    %793 = vmatprep.subr.mxu0 0.0
    %794 = vmatpush1.msra.mxu0 0.0
    %795 = vmatprep.subr.mxu0 0.0
    %796 = vmatpush1.msra.mxu0 0.0
    %797 = vmatprep.subr.mxu0 0.0
    %798 = vmatpush1.msra.mxu0 0.0
    %799 = vmatprep.mubr.f32.mxu0 0.0
    %800 = vmatmul.mubr.f32.gmra.mrb[0].mxu0 %v733
    %v801 = vpop.f32.mrb[0].mxu0
    %v802 = vadd.f32 %v267, %v801
    %v803 = vpop.f32.mrb[0].mxu0
    %804 = vdwg.mxu0
    %v806 = vrot.slane %v802, 5
    %v807 = vrot.slane %v802, 6
    %v810 = vadd.f32 %v248, %v806
    %v811 = vadd.f32 %v253, %v807
    %v812 = vxor.u32 %v810, 2147483648
    %v813 = vxor.u32 %v811, 2147483648
    %v814 = vmul.f32 %v812, 1.442695
    %v815 = vpow.pop %v814
    %v816 = vmul.f32 %v813, 1.442695
    %v817 = vpow.pop %v816
    %v818 = vadd.f32 %v815, 1.0
    %v819 = vadd.f32 %v817, 1.0
    %v820 = vrcp.pop %v818
    %v821 = vmul.f32 1.0, %v820
    %v822 = vrcp.pop %v819
    %v823 = vmul.f32 1.0, %v822
    %824 = vrot.lane.b32.xlu0 %v806, 64
    %v825 = vpop.permute.xlu0 %824
    %826 = vrot.lane.b32.xlu0 %v807, 64
    %v827 = vpop.permute.xlu0 %826
    %v830 = vmul.f32 %v821, %v825
    %v831 = vmul.f32 %v823, %v827
    %834 = vrot.lane.b32.xlu0 %v830, 64
    %v835 = vpop.permute.xlu0 %834
    %836 = vrot.lane.b32.xlu0 %v831, 64
    %v837 = vpop.permute.xlu0 %836
    %v840 = vadd.f32 %v248, %v835
    %v841 = vadd.f32 %v253, %v837
    %v842 = vtanh.pop %v840
    %v843 = vtanh.pop %v841
    %v844 = vsub.f32 1.0, %v821
    %v845 = vsub.f32 1.0, %v823
    %848 = vrot.lane.b32.xlu0 %v842, 96
    %v849 = vpop.permute.xlu0 %848
    %850 = vrot.lane.b32.xlu0 %v843, 96
    %v851 = vpop.permute.xlu0 %850
    %v854 = vmul.f32 %v844, %v849
    %v855 = vmul.f32 %v845, %v851
    %v856 = vrot.slane %v731, 5
    %v857 = vrot.slane %v731, 6
    %858 = vrot.lane.b32.xlu0 %v856, 32
    %v859 = vpop.permute.xlu0 %858
    %860 = vrot.lane.b32.xlu0 %v857, 32
    %v861 = vpop.permute.xlu0 %860
    %v864 = vmul.f32 %v821, %v859
    %v865 = vmul.f32 %v823, %v861
    %v866 = vadd.f32 %v854, %v864
    %v867 = vadd.f32 %v855, %v865
    %868 = vset.pattern.permute.xlu0 3
    %869 = vperm.xlu0 %868, %v256
    %v870 = vpop.permute.xlu0 %869
    %v874 = vrot.slane %v866, 3
    %v875 = vrot.slane %v867, 2
    %v876 = vsel %vm411, %v875, %v874
    %877 = vrot.lane.b32.xlu0 %v876, 96
    %v878 = vpop.permute.xlu0 %877
    %v880 = vmul.f32 %v870, %v878
    %881 = vset.pattern.permute.xlu0 3
    %882 = vperm.xlu0 %881, %v417
    %v883 = vpop.permute.xlu0 %882
    %v885 = vmul.f32 %v883, %v731
    %v886 = vadd.f32 %v880, %v885
    %v888 = vsel %vm174, %v886, 0
    %890 = vmatprep.subr.mxu0 0.0
    %891 = vmatpush1.msra.mxu0 %v257
    %892 = vmatprep.subr.mxu0 0.0
    %893 = vmatpush1.msra.mxu0 %v258
    %894 = vmatprep.subr.mxu0 0.0
    %895 = vmatpush1.msra.mxu0 %v259
    %896 = vmatprep.subr.mxu0 0.0
    %897 = vmatpush1.msra.mxu0 %v260
    %898 = vmatprep.subr.mxu0 0.0
    %899 = vmatpush1.msra.mxu0 0.0
    %900 = vmatprep.subr.mxu0 0.0
    %901 = vmatpush1.msra.mxu0 0.0
    %902 = vmatprep.subr.mxu0 0.0
    %903 = vmatpush1.msra.mxu0 0.0
    %904 = vmatprep.subr.mxu0 0.0
    %905 = vmatpush1.msra.mxu0 0.0
    %906 = vmatprep.subr.mxu0 0.0
    %907 = vmatpush1.msra.mxu0 0.0
    %908 = vmatprep.subr.mxu0 0.0
    %909 = vmatpush1.msra.mxu0 0.0
    %910 = vmatprep.subr.mxu0 0.0
    %911 = vmatpush1.msra.mxu0 0.0
    %912 = vmatprep.subr.mxu0 0.0
    %913 = vmatpush1.msra.mxu0 0.0
    %914 = vmatprep.subr.mxu0 0.0
    %915 = vmatpush1.msra.mxu0 0.0
    %916 = vmatprep.subr.mxu0 0.0
    %917 = vmatpush1.msra.mxu0 0.0
    %918 = vmatprep.subr.mxu0 0.0
    %919 = vmatpush1.msra.mxu0 0.0
    %920 = vmatprep.subr.mxu0 0.0
    %921 = vmatpush1.msra.mxu0 0.0
    %922 = vmatprep.subr.mxu0 0.0
    %923 = vmatpush1.msra.mxu0 0.0
    %924 = vmatprep.subr.mxu0 0.0
    %925 = vmatpush1.msra.mxu0 0.0
    %926 = vmatprep.subr.mxu0 0.0
    %927 = vmatpush1.msra.mxu0 0.0
    %928 = vmatprep.subr.mxu0 0.0
    %929 = vmatpush1.msra.mxu0 0.0
    %930 = vmatprep.subr.mxu0 0.0
    %931 = vmatpush1.msra.mxu0 0.0
    %932 = vmatprep.subr.mxu0 0.0
    %933 = vmatpush1.msra.mxu0 0.0
    %934 = vmatprep.subr.mxu0 0.0
    %935 = vmatpush1.msra.mxu0 0.0
    %936 = vmatprep.subr.mxu0 0.0
    %937 = vmatpush1.msra.mxu0 0.0
    %938 = vmatprep.subr.mxu0 0.0
    %939 = vmatpush1.msra.mxu0 0.0
    %940 = vmatprep.subr.mxu0 0.0
    %941 = vmatpush1.msra.mxu0 0.0
    %942 = vmatprep.subr.mxu0 0.0
    %943 = vmatpush1.msra.mxu0 0.0
    %944 = vmatprep.subr.mxu0 0.0
    %945 = vmatpush1.msra.mxu0 0.0
    %946 = vmatprep.subr.mxu0 0.0
    %947 = vmatpush1.msra.mxu0 0.0
    %948 = vmatprep.subr.mxu0 0.0
    %949 = vmatpush1.msra.mxu0 0.0
    %950 = vmatprep.subr.mxu0 0.0
    %951 = vmatpush1.msra.mxu0 0.0
    %952 = vmatprep.subr.mxu0 0.0
    %953 = vmatpush1.msra.mxu0 0.0
    %954 = vmatprep.mubr.f32.mxu0 0.0
    %955 = vmatmul.mubr.f32.gmra.mrb[0].mxu0 %v888
    %v956 = vpop.f32.mrb[0].mxu0
    %v957 = vadd.f32 %v267, %v956
    %v958 = vpop.f32.mrb[0].mxu0
    %959 = vdwg.mxu0
    %v961 = vrot.slane %v957, 4
    %v962 = vrot.slane %v957, 5
    %v965 = vadd.f32 %v248, %v961
    %v966 = vadd.f32 %v253, %v962
    %v967 = vxor.u32 %v965, 2147483648
    %v968 = vxor.u32 %v966, 2147483648
    %v969 = vmul.f32 %v967, 1.442695
    %v970 = vpow.pop %v969
    %v971 = vmul.f32 %v968, 1.442695
    %v972 = vpow.pop %v971
    %v973 = vadd.f32 %v970, 1.0
    %v974 = vadd.f32 %v972, 1.0
    %v975 = vrcp.pop %v973
    %v976 = vmul.f32 1.0, %v975
    %v977 = vrcp.pop %v974
    %v978 = vmul.f32 1.0, %v977
    %979 = vrot.lane.b32.xlu0 %v961, 64
    %v980 = vpop.permute.xlu0 %979
    %981 = vrot.lane.b32.xlu0 %v962, 64
    %v982 = vpop.permute.xlu0 %981
    %v985 = vmul.f32 %v976, %v980
    %v986 = vmul.f32 %v978, %v982
    %989 = vrot.lane.b32.xlu0 %v985, 64
    %v990 = vpop.permute.xlu0 %989
    %991 = vrot.lane.b32.xlu0 %v986, 64
    %v992 = vpop.permute.xlu0 %991
    %v995 = vadd.f32 %v248, %v990
    %v996 = vadd.f32 %v253, %v992
    %v997 = vtanh.pop %v995
    %v998 = vtanh.pop %v996
    %v999 = vsub.f32 1.0, %v976
    %v1000 = vsub.f32 1.0, %v978
    %1003 = vrot.lane.b32.xlu0 %v997, 96
    %v1004 = vpop.permute.xlu0 %1003
    %1005 = vrot.lane.b32.xlu0 %v998, 96
    %v1006 = vpop.permute.xlu0 %1005
    %v1009 = vmul.f32 %v999, %v1004
    %v1010 = vmul.f32 %v1000, %v1006
    %v1011 = vrot.slane %v886, 4
    %v1012 = vrot.slane %v886, 5
    %1013 = vrot.lane.b32.xlu0 %v1011, 32
    %v1014 = vpop.permute.xlu0 %1013
    %1015 = vrot.lane.b32.xlu0 %v1012, 32
    %v1016 = vpop.permute.xlu0 %1015
    %v1019 = vmul.f32 %v976, %v1014
    %v1020 = vmul.f32 %v978, %v1016
    %v1021 = vadd.f32 %v1009, %v1019
    %v1022 = vadd.f32 %v1010, %v1020
    %1023 = vset.pattern.permute.xlu0 4
    %1024 = vperm.xlu0 %1023, %v256
    %v1025 = vpop.permute.xlu0 %1024
    %v1029 = vrot.slane %v1021, 4
    %v1030 = vrot.slane %v1022, 3
    %v1031 = vsel %vm411, %v1030, %v1029
    %1032 = vrot.lane.b32.xlu0 %v1031, 96
    %v1033 = vpop.permute.xlu0 %1032
    %v1035 = vmul.f32 %v1025, %v1033
    %1036 = vset.pattern.permute.xlu0 4
    %1037 = vperm.xlu0 %1036, %v417
    %v1038 = vpop.permute.xlu0 %1037
    %v1040 = vmul.f32 %v1038, %v886
    %v1041 = vadd.f32 %v1035, %v1040
    %v1043 = vsel %vm174, %v1041, 0
    %1045 = vmatprep.subr.mxu0 0.0
    %1046 = vmatpush1.msra.mxu0 %v257
    %1047 = vmatprep.subr.mxu0 0.0
    %1048 = vmatpush1.msra.mxu0 %v258
    %1049 = vmatprep.subr.mxu0 0.0
    %1050 = vmatpush1.msra.mxu0 %v259
    %1051 = vmatprep.subr.mxu0 0.0
    %1052 = vmatpush1.msra.mxu0 %v260
    %1053 = vmatprep.subr.mxu0 0.0
    %1054 = vmatpush1.msra.mxu0 0.0
    %1055 = vmatprep.subr.mxu0 0.0
    %1056 = vmatpush1.msra.mxu0 0.0
    %1057 = vmatprep.subr.mxu0 0.0
    %1058 = vmatpush1.msra.mxu0 0.0
    %1059 = vmatprep.subr.mxu0 0.0
    %1060 = vmatpush1.msra.mxu0 0.0
    %1061 = vmatprep.subr.mxu0 0.0
    %1062 = vmatpush1.msra.mxu0 0.0
    %1063 = vmatprep.subr.mxu0 0.0
    %1064 = vmatpush1.msra.mxu0 0.0
    %1065 = vmatprep.subr.mxu0 0.0
    %1066 = vmatpush1.msra.mxu0 0.0
    %1067 = vmatprep.subr.mxu0 0.0
    %1068 = vmatpush1.msra.mxu0 0.0
    %1069 = vmatprep.subr.mxu0 0.0
    %1070 = vmatpush1.msra.mxu0 0.0
    %1071 = vmatprep.subr.mxu0 0.0
    %1072 = vmatpush1.msra.mxu0 0.0
    %1073 = vmatprep.subr.mxu0 0.0
    %1074 = vmatpush1.msra.mxu0 0.0
    %1075 = vmatprep.subr.mxu0 0.0
    %1076 = vmatpush1.msra.mxu0 0.0
    %1077 = vmatprep.subr.mxu0 0.0
    %1078 = vmatpush1.msra.mxu0 0.0
    %1079 = vmatprep.subr.mxu0 0.0
    %1080 = vmatpush1.msra.mxu0 0.0
    %1081 = vmatprep.subr.mxu0 0.0
    %1082 = vmatpush1.msra.mxu0 0.0
    %1083 = vmatprep.subr.mxu0 0.0
    %1084 = vmatpush1.msra.mxu0 0.0
    %1085 = vmatprep.subr.mxu0 0.0
    %1086 = vmatpush1.msra.mxu0 0.0
    %1087 = vmatprep.subr.mxu0 0.0
    %1088 = vmatpush1.msra.mxu0 0.0
    %1089 = vmatprep.subr.mxu0 0.0
    %1090 = vmatpush1.msra.mxu0 0.0
    %1091 = vmatprep.subr.mxu0 0.0
    %1092 = vmatpush1.msra.mxu0 0.0
    %1093 = vmatprep.subr.mxu0 0.0
    %1094 = vmatpush1.msra.mxu0 0.0
    %1095 = vmatprep.subr.mxu0 0.0
    %1096 = vmatpush1.msra.mxu0 0.0
    %1097 = vmatprep.subr.mxu0 0.0
    %1098 = vmatpush1.msra.mxu0 0.0
    %1099 = vmatprep.subr.mxu0 0.0
    %1100 = vmatpush1.msra.mxu0 0.0
    %1101 = vmatprep.subr.mxu0 0.0
    %1102 = vmatpush1.msra.mxu0 0.0
    %1103 = vmatprep.subr.mxu0 0.0
    %1104 = vmatpush1.msra.mxu0 0.0
    %1105 = vmatprep.subr.mxu0 0.0
    %1106 = vmatpush1.msra.mxu0 0.0
    %1107 = vmatprep.subr.mxu0 0.0
    %1108 = vmatpush1.msra.mxu0 0.0
    %1109 = vmatprep.mubr.f32.mxu0 0.0
    %1110 = vmatmul.mubr.f32.gmra.mrb[0].mxu0 %v1043
    %v1111 = vpop.f32.mrb[0].mxu0
    %v1112 = vadd.f32 %v267, %v1111
    %v1113 = vpop.f32.mrb[0].mxu0
    %1114 = vdwg.mxu0
    %v1116 = vrot.slane %v1112, 3
    %v1117 = vrot.slane %v1112, 4
    %v1120 = vadd.f32 %v248, %v1116
    %v1121 = vadd.f32 %v253, %v1117
    %v1122 = vxor.u32 %v1120, 2147483648
    %v1123 = vxor.u32 %v1121, 2147483648
    %v1124 = vmul.f32 %v1122, 1.442695
    %v1125 = vpow.pop %v1124
    %v1126 = vmul.f32 %v1123, 1.442695
    %v1127 = vpow.pop %v1126
    %v1128 = vadd.f32 %v1125, 1.0
    %v1129 = vadd.f32 %v1127, 1.0
    %v1130 = vrcp.pop %v1128
    %v1131 = vmul.f32 1.0, %v1130
    %v1132 = vrcp.pop %v1129
    %v1133 = vmul.f32 1.0, %v1132
    %1134 = vrot.lane.b32.xlu0 %v1116, 64
    %v1135 = vpop.permute.xlu0 %1134
    %1136 = vrot.lane.b32.xlu0 %v1117, 64
    %v1137 = vpop.permute.xlu0 %1136
    %v1140 = vmul.f32 %v1131, %v1135
    %v1141 = vmul.f32 %v1133, %v1137
    %1144 = vrot.lane.b32.xlu0 %v1140, 64
    %v1145 = vpop.permute.xlu0 %1144
    %1146 = vrot.lane.b32.xlu0 %v1141, 64
    %v1147 = vpop.permute.xlu0 %1146
    %v1150 = vadd.f32 %v248, %v1145
    %v1151 = vadd.f32 %v253, %v1147
    %v1152 = vtanh.pop %v1150
    %v1153 = vtanh.pop %v1151
    %v1154 = vsub.f32 1.0, %v1131
    %v1155 = vsub.f32 1.0, %v1133
    %1158 = vrot.lane.b32.xlu0 %v1152, 96
    %v1159 = vpop.permute.xlu0 %1158
    %1160 = vrot.lane.b32.xlu0 %v1153, 96
    %v1161 = vpop.permute.xlu0 %1160
    %v1164 = vmul.f32 %v1154, %v1159
    %v1165 = vmul.f32 %v1155, %v1161
    %v1166 = vrot.slane %v1041, 3
    %v1167 = vrot.slane %v1041, 4
    %1168 = vrot.lane.b32.xlu0 %v1166, 32
    %v1169 = vpop.permute.xlu0 %1168
    %1170 = vrot.lane.b32.xlu0 %v1167, 32
    %v1171 = vpop.permute.xlu0 %1170
    %v1174 = vmul.f32 %v1131, %v1169
    %v1175 = vmul.f32 %v1133, %v1171
    %v1176 = vadd.f32 %v1164, %v1174
    %v1177 = vadd.f32 %v1165, %v1175
    %1178 = vset.pattern.permute.xlu0 5
    %1179 = vperm.xlu0 %1178, %v256
    %v1180 = vpop.permute.xlu0 %1179
    %v1184 = vrot.slane %v1176, 5
    %v1185 = vrot.slane %v1177, 4
    %v1186 = vsel %vm411, %v1185, %v1184
    %1187 = vrot.lane.b32.xlu0 %v1186, 96
    %v1188 = vpop.permute.xlu0 %1187
    %v1190 = vmul.f32 %v1180, %v1188
    %1191 = vset.pattern.permute.xlu0 5
    %1192 = vperm.xlu0 %1191, %v417
    %v1193 = vpop.permute.xlu0 %1192
    %v1195 = vmul.f32 %v1193, %v1041
    %v1196 = vadd.f32 %v1190, %v1195
    %v1198 = vsel %vm174, %v1196, 0
    %1200 = vmatprep.subr.mxu0 0.0
    %1201 = vmatpush1.msra.mxu0 %v257
    %1202 = vmatprep.subr.mxu0 0.0
    %1203 = vmatpush1.msra.mxu0 %v258
    %1204 = vmatprep.subr.mxu0 0.0
    %1205 = vmatpush1.msra.mxu0 %v259
    %1206 = vmatprep.subr.mxu0 0.0
    %1207 = vmatpush1.msra.mxu0 %v260
    %1208 = vmatprep.subr.mxu0 0.0
    %1209 = vmatpush1.msra.mxu0 0.0
    %1210 = vmatprep.subr.mxu0 0.0
    %1211 = vmatpush1.msra.mxu0 0.0
    %1212 = vmatprep.subr.mxu0 0.0
    %1213 = vmatpush1.msra.mxu0 0.0
    %1214 = vmatprep.subr.mxu0 0.0
    %1215 = vmatpush1.msra.mxu0 0.0
    %1216 = vmatprep.subr.mxu0 0.0
    %1217 = vmatpush1.msra.mxu0 0.0
    %1218 = vmatprep.subr.mxu0 0.0
    %1219 = vmatpush1.msra.mxu0 0.0
    %1220 = vmatprep.subr.mxu0 0.0
    %1221 = vmatpush1.msra.mxu0 0.0
    %1222 = vmatprep.subr.mxu0 0.0
    %1223 = vmatpush1.msra.mxu0 0.0
    %1224 = vmatprep.subr.mxu0 0.0
    %1225 = vmatpush1.msra.mxu0 0.0
    %1226 = vmatprep.subr.mxu0 0.0
    %1227 = vmatpush1.msra.mxu0 0.0
    %1228 = vmatprep.subr.mxu0 0.0
    %1229 = vmatpush1.msra.mxu0 0.0
    %1230 = vmatprep.subr.mxu0 0.0
    %1231 = vmatpush1.msra.mxu0 0.0
    %1232 = vmatprep.subr.mxu0 0.0
    %1233 = vmatpush1.msra.mxu0 0.0
    %1234 = vmatprep.subr.mxu0 0.0
    %1235 = vmatpush1.msra.mxu0 0.0
    %1236 = vmatprep.subr.mxu0 0.0
    %1237 = vmatpush1.msra.mxu0 0.0
    %1238 = vmatprep.subr.mxu0 0.0
    %1239 = vmatpush1.msra.mxu0 0.0
    %1240 = vmatprep.subr.mxu0 0.0
    %1241 = vmatpush1.msra.mxu0 0.0
    %1242 = vmatprep.subr.mxu0 0.0
    %1243 = vmatpush1.msra.mxu0 0.0
    %1244 = vmatprep.subr.mxu0 0.0
    %1245 = vmatpush1.msra.mxu0 0.0
    %1246 = vmatprep.subr.mxu0 0.0
    %1247 = vmatpush1.msra.mxu0 0.0
    %1248 = vmatprep.subr.mxu0 0.0
    %1249 = vmatpush1.msra.mxu0 0.0
    %1250 = vmatprep.subr.mxu0 0.0
    %1251 = vmatpush1.msra.mxu0 0.0
    %1252 = vmatprep.subr.mxu0 0.0
    %1253 = vmatpush1.msra.mxu0 0.0
    %1254 = vmatprep.subr.mxu0 0.0
    %1255 = vmatpush1.msra.mxu0 0.0
    %1256 = vmatprep.subr.mxu0 0.0
    %1257 = vmatpush1.msra.mxu0 0.0
    %1258 = vmatprep.subr.mxu0 0.0
    %1259 = vmatpush1.msra.mxu0 0.0
    %1260 = vmatprep.subr.mxu0 0.0
    %1261 = vmatpush1.msra.mxu0 0.0
    %1262 = vmatprep.subr.mxu0 0.0
    %1263 = vmatpush1.msra.mxu0 0.0
    %1264 = vmatprep.mubr.f32.mxu0 0.0
    %1265 = vmatmul.mubr.f32.gmra.mrb[0].mxu0 %v1198
    %v1266 = vpop.f32.mrb[0].mxu0
    %v1267 = vadd.f32 %v267, %v1266
    %v1268 = vpop.f32.mrb[0].mxu0
    %1269 = vdwg.mxu0
    %v1271 = vrot.slane %v1267, 2
    %v1272 = vrot.slane %v1267, 3
    %v1275 = vadd.f32 %v248, %v1271
    %v1276 = vadd.f32 %v253, %v1272
    %v1277 = vxor.u32 %v1275, 2147483648
    %v1278 = vxor.u32 %v1276, 2147483648
    %v1279 = vmul.f32 %v1277, 1.442695
    %v1280 = vpow.pop %v1279
    %v1281 = vmul.f32 %v1278, 1.442695
    %v1282 = vpow.pop %v1281
    %v1283 = vadd.f32 %v1280, 1.0
    %v1284 = vadd.f32 %v1282, 1.0
    %v1285 = vrcp.pop %v1283
    %v1286 = vmul.f32 1.0, %v1285
    %v1287 = vrcp.pop %v1284
    %v1288 = vmul.f32 1.0, %v1287
    %1289 = vrot.lane.b32.xlu0 %v1271, 64
    %v1290 = vpop.permute.xlu0 %1289
    %1291 = vrot.lane.b32.xlu0 %v1272, 64
    %v1292 = vpop.permute.xlu0 %1291
    %v1295 = vmul.f32 %v1286, %v1290
    %v1296 = vmul.f32 %v1288, %v1292
    %1299 = vrot.lane.b32.xlu0 %v1295, 64
    %v1300 = vpop.permute.xlu0 %1299
    %1301 = vrot.lane.b32.xlu0 %v1296, 64
    %v1302 = vpop.permute.xlu0 %1301
    %v1305 = vadd.f32 %v248, %v1300
    %v1306 = vadd.f32 %v253, %v1302
    %v1307 = vtanh.pop %v1305
    %v1308 = vtanh.pop %v1306
    %v1309 = vsub.f32 1.0, %v1286
    %v1310 = vsub.f32 1.0, %v1288
    %1313 = vrot.lane.b32.xlu0 %v1307, 96
    %v1314 = vpop.permute.xlu0 %1313
    %1315 = vrot.lane.b32.xlu0 %v1308, 96
    %v1316 = vpop.permute.xlu0 %1315
    %v1319 = vmul.f32 %v1309, %v1314
    %v1320 = vmul.f32 %v1310, %v1316
    %v1321 = vrot.slane %v1196, 2
    %v1322 = vrot.slane %v1196, 3
    %1323 = vrot.lane.b32.xlu0 %v1321, 32
    %v1324 = vpop.permute.xlu0 %1323
    %1325 = vrot.lane.b32.xlu0 %v1322, 32
    %v1326 = vpop.permute.xlu0 %1325
    %v1329 = vmul.f32 %v1286, %v1324
    %v1330 = vmul.f32 %v1288, %v1326
    %v1331 = vadd.f32 %v1319, %v1329
    %v1332 = vadd.f32 %v1320, %v1330
    %1333 = vset.pattern.permute.xlu0 6
    %1334 = vperm.xlu0 %1333, %v256
    %v1335 = vpop.permute.xlu0 %1334
    %v1339 = vrot.slane %v1331, 6
    %v1340 = vrot.slane %v1332, 5
    %v1341 = vsel %vm411, %v1340, %v1339
    %1342 = vrot.lane.b32.xlu0 %v1341, 96
    %v1343 = vpop.permute.xlu0 %1342
    %v1345 = vmul.f32 %v1335, %v1343
    %1346 = vset.pattern.permute.xlu0 6
    %1347 = vperm.xlu0 %1346, %v417
    %v1348 = vpop.permute.xlu0 %1347
    %v1350 = vmul.f32 %v1348, %v1196
    %v1351 = vadd.f32 %v1345, %v1350
    %v1353 = vsel %vm174, %v1351, 0
    %1355 = vmatprep.subr.mxu0 0.0
    %1356 = vmatpush1.msra.mxu0 %v257
    %1357 = vmatprep.subr.mxu0 0.0
    %1358 = vmatpush1.msra.mxu0 %v258
    %1359 = vmatprep.subr.mxu0 0.0
    %1360 = vmatpush1.msra.mxu0 %v259
    %1361 = vmatprep.subr.mxu0 0.0
    %1362 = vmatpush1.msra.mxu0 %v260
    %1363 = vmatprep.subr.mxu0 0.0
    %1364 = vmatpush1.msra.mxu0 0.0
    %1365 = vmatprep.subr.mxu0 0.0
    %1366 = vmatpush1.msra.mxu0 0.0
    %1367 = vmatprep.subr.mxu0 0.0
    %1368 = vmatpush1.msra.mxu0 0.0
    %1369 = vmatprep.subr.mxu0 0.0
    %1370 = vmatpush1.msra.mxu0 0.0
    %1371 = vmatprep.subr.mxu0 0.0
    %1372 = vmatpush1.msra.mxu0 0.0
    %1373 = vmatprep.subr.mxu0 0.0
    %1374 = vmatpush1.msra.mxu0 0.0
    %1375 = vmatprep.subr.mxu0 0.0
    %1376 = vmatpush1.msra.mxu0 0.0
    %1377 = vmatprep.subr.mxu0 0.0
    %1378 = vmatpush1.msra.mxu0 0.0
    %1379 = vmatprep.subr.mxu0 0.0
    %1380 = vmatpush1.msra.mxu0 0.0
    %1381 = vmatprep.subr.mxu0 0.0
    %1382 = vmatpush1.msra.mxu0 0.0
    %1383 = vmatprep.subr.mxu0 0.0
    %1384 = vmatpush1.msra.mxu0 0.0
    %1385 = vmatprep.subr.mxu0 0.0
    %1386 = vmatpush1.msra.mxu0 0.0
    %1387 = vmatprep.subr.mxu0 0.0
    %1388 = vmatpush1.msra.mxu0 0.0
    %1389 = vmatprep.subr.mxu0 0.0
    %1390 = vmatpush1.msra.mxu0 0.0
    %1391 = vmatprep.subr.mxu0 0.0
    %1392 = vmatpush1.msra.mxu0 0.0
    %1393 = vmatprep.subr.mxu0 0.0
    %1394 = vmatpush1.msra.mxu0 0.0
    %1395 = vmatprep.subr.mxu0 0.0
    %1396 = vmatpush1.msra.mxu0 0.0
    %1397 = vmatprep.subr.mxu0 0.0
    %1398 = vmatpush1.msra.mxu0 0.0
    %1399 = vmatprep.subr.mxu0 0.0
    %1400 = vmatpush1.msra.mxu0 0.0
    %1401 = vmatprep.subr.mxu0 0.0
    %1402 = vmatpush1.msra.mxu0 0.0
    %1403 = vmatprep.subr.mxu0 0.0
    %1404 = vmatpush1.msra.mxu0 0.0
    %1405 = vmatprep.subr.mxu0 0.0
    %1406 = vmatpush1.msra.mxu0 0.0
    %1407 = vmatprep.subr.mxu0 0.0
    %1408 = vmatpush1.msra.mxu0 0.0
    %1409 = vmatprep.subr.mxu0 0.0
    %1410 = vmatpush1.msra.mxu0 0.0
    %1411 = vmatprep.subr.mxu0 0.0
    %1412 = vmatpush1.msra.mxu0 0.0
    %1413 = vmatprep.subr.mxu0 0.0
    %1414 = vmatpush1.msra.mxu0 0.0
    %1415 = vmatprep.subr.mxu0 0.0
    %1416 = vmatpush1.msra.mxu0 0.0
    %1417 = vmatprep.subr.mxu0 0.0
    %1418 = vmatpush1.msra.mxu0 0.0
    %1419 = vmatprep.mubr.f32.mxu0 0.0
    %1420 = vmatmul.mubr.f32.gmra.mrb[0].mxu0 %v1353
    %v1421 = vpop.f32.mrb[0].mxu0
    %v1422 = vadd.f32 %v267, %v1421
    %v1423 = vpop.f32.mrb[0].mxu0
    %1424 = vdwg.mxu0
    %v1426 = vrot.slane %v1422, 1
    %v1427 = vrot.slane %v1422, 2
    %v1430 = vadd.f32 %v248, %v1426
    %v1431 = vadd.f32 %v253, %v1427
    %v1432 = vxor.u32 %v1430, 2147483648
    %v1433 = vxor.u32 %v1431, 2147483648
    %v1434 = vmul.f32 %v1432, 1.442695
    %v1435 = vpow.pop %v1434
    %v1436 = vmul.f32 %v1433, 1.442695
    %v1437 = vpow.pop %v1436
    %v1438 = vadd.f32 %v1435, 1.0
    %v1439 = vadd.f32 %v1437, 1.0
    %v1440 = vrcp.pop %v1438
    %v1441 = vmul.f32 1.0, %v1440
    %v1442 = vrcp.pop %v1439
    %v1443 = vmul.f32 1.0, %v1442
    %1444 = vrot.lane.b32.xlu0 %v1426, 64
    %v1445 = vpop.permute.xlu0 %1444
    %1446 = vrot.lane.b32.xlu0 %v1427, 64
    %v1447 = vpop.permute.xlu0 %1446
    %v1450 = vmul.f32 %v1441, %v1445
    %v1451 = vmul.f32 %v1443, %v1447
    %1454 = vrot.lane.b32.xlu0 %v1450, 64
    %v1455 = vpop.permute.xlu0 %1454
    %1456 = vrot.lane.b32.xlu0 %v1451, 64
    %v1457 = vpop.permute.xlu0 %1456
    %v1460 = vadd.f32 %v248, %v1455
    %v1461 = vadd.f32 %v253, %v1457
    %v1462 = vtanh.pop %v1460
    %v1463 = vtanh.pop %v1461
    %v1464 = vsub.f32 1.0, %v1441
    %v1465 = vsub.f32 1.0, %v1443
    %1468 = vrot.lane.b32.xlu0 %v1462, 96
    %v1469 = vpop.permute.xlu0 %1468
    %1470 = vrot.lane.b32.xlu0 %v1463, 96
    %v1471 = vpop.permute.xlu0 %1470
    %v1474 = vmul.f32 %v1464, %v1469
    %v1475 = vmul.f32 %v1465, %v1471
    %v1476 = vrot.slane %v1351, 1
    %v1477 = vrot.slane %v1351, 2
    %1478 = vrot.lane.b32.xlu0 %v1476, 32
    %v1479 = vpop.permute.xlu0 %1478
    %1480 = vrot.lane.b32.xlu0 %v1477, 32
    %v1481 = vpop.permute.xlu0 %1480
    %v1484 = vmul.f32 %v1441, %v1479
    %v1485 = vmul.f32 %v1443, %v1481
    %v1486 = vadd.f32 %v1474, %v1484
    %v1487 = vadd.f32 %v1475, %v1485
    %1488 = vset.pattern.permute.xlu0 7
    %1489 = vperm.xlu0 %1488, %v256
    %v1490 = vpop.permute.xlu0 %1489
    %v1494 = vrot.slane %v1486, 7
    %v1495 = vrot.slane %v1487, 6
    %v1496 = vsel %vm411, %v1495, %v1494
    %1497 = vrot.lane.b32.xlu0 %v1496, 96
    %v1498 = vpop.permute.xlu0 %1497
    %v1500 = vmul.f32 %v1490, %v1498
    %1501 = vset.pattern.permute.xlu0 7
    %1502 = vperm.xlu0 %1501, %v417
    %v1503 = vpop.permute.xlu0 %1502
    %v1505 = vmul.f32 %v1503, %v1351
    %v1506 = vadd.f32 %v1500, %v1505
    %vm1507 = vcmask 254976
    %1508 = vst.msk [vmem:[#allocation4] sm:$0x3] %vm1507, %v1506
    %v1511 = vunpack.c.l.s4 1966171168
    %v1512 = vunpack.c.0.s8 %v1511
    %v1513 = vlaneseq
    %v1514 = vshrl.u32 %v1513, 7
    %v1515 = vsub.s32 %v1512, %v1514
    %v1516 = vrot.slane %v416, %v1515
    %v1517 = vcombine.high %v1516, %v1516
    %v1519 = vunpack.c.l.s4 1966171168
    %v1520 = vunpack.c.0.s8 %v1519
    %v1521 = vlaneseq
    %v1522 = vshrl.u32 %v1521, 7
    %v1523 = vsub.s32 %v1520, %v1522
    %v1524 = vrot.slane %v1516, %v1523
    %v1526 = vunpack.c.l.s4 1966171168
    %v1527 = vunpack.c.0.s8 %v1526
    %v1528 = vlaneseq
    %v1529 = vshrl.u32 %v1528, 7
    %v1530 = vsub.s32 %v1527, %v1529
    %v1531 = vrot.slane %v1517, %v1530
    %v1536 = vunpack.c.l.s4 1966171168
    %v1537 = vunpack.c.0.s8 %v1536
    %v1538 = vlaneseq
    %v1539 = vshrl.u32 %v1538, 7
    %v1540 = vsub.s32 %v1537, %v1539
    %v1541 = vrot.slane %v570, %v1540
    %v1542 = vcombine.high %v1541, %v1541
    %v1544 = vunpack.c.l.s4 1966171168
    %v1545 = vunpack.c.0.s8 %v1544
    %v1546 = vlaneseq
    %v1547 = vshrl.u32 %v1546, 7
    %v1548 = vsub.s32 %v1545, %v1547
    %v1549 = vrot.slane %v1541, %v1548
    %v1551 = vunpack.c.l.s4 1966171168
    %v1552 = vunpack.c.0.s8 %v1551
    %v1553 = vlaneseq
    %v1554 = vshrl.u32 %v1553, 7
    %v1555 = vsub.s32 %v1552, %v1554
    %v1556 = vrot.slane %v1542, %v1555
    %v1559 = vunpack.c.l.s4 1966171168
    %v1560 = vunpack.c.0.s8 %v1559
    %v1561 = vlaneseq
    %v1562 = vshrl.u32 %v1561, 7
    %v1563 = vsub.s32 %v1560, %v1562
    %v1564 = vrot.slane %v725, %v1563
    %v1565 = vcombine.high %v1564, %v1564
    %v1567 = vunpack.c.l.s4 1966171168
    %v1568 = vunpack.c.0.s8 %v1567
    %v1569 = vlaneseq
    %v1570 = vshrl.u32 %v1569, 7
    %v1571 = vsub.s32 %v1568, %v1570
    %v1572 = vrot.slane %v1564, %v1571
    %v1574 = vunpack.c.l.s4 1966171168
    %v1575 = vunpack.c.0.s8 %v1574
    %v1576 = vlaneseq
    %v1577 = vshrl.u32 %v1576, 7
    %v1578 = vsub.s32 %v1575, %v1577
    %v1579 = vrot.slane %v1565, %v1578
    %v1582 = vunpack.c.l.s4 1966171168
    %v1583 = vunpack.c.0.s8 %v1582
    %v1584 = vlaneseq
    %v1585 = vshrl.u32 %v1584, 7
    %v1586 = vsub.s32 %v1583, %v1585
    %v1587 = vrot.slane %v880, %v1586
    %v1588 = vcombine.high %v1587, %v1587
    %v1590 = vunpack.c.l.s4 1966171168
    %v1591 = vunpack.c.0.s8 %v1590
    %v1592 = vlaneseq
    %v1593 = vshrl.u32 %v1592, 7
    %v1594 = vsub.s32 %v1591, %v1593
    %v1595 = vrot.slane %v1587, %v1594
    %v1597 = vunpack.c.l.s4 1966171168
    %v1598 = vunpack.c.0.s8 %v1597
    %v1599 = vlaneseq
    %v1600 = vshrl.u32 %v1599, 7
    %v1601 = vsub.s32 %v1598, %v1600
    %v1602 = vrot.slane %v1588, %v1601
    %v1605 = vunpack.c.l.s4 1966171168
    %v1606 = vunpack.c.0.s8 %v1605
    %v1607 = vlaneseq
    %v1608 = vshrl.u32 %v1607, 7
    %v1609 = vsub.s32 %v1606, %v1608
    %v1610 = vrot.slane %v1035, %v1609
    %v1611 = vcombine.high %v1610, %v1610
    %v1613 = vunpack.c.l.s4 1966171168
    %v1614 = vunpack.c.0.s8 %v1613
    %v1615 = vlaneseq
    %v1616 = vshrl.u32 %v1615, 7
    %v1617 = vsub.s32 %v1614, %v1616
    %v1618 = vrot.slane %v1610, %v1617
    %v1620 = vunpack.c.l.s4 1966171168
    %v1621 = vunpack.c.0.s8 %v1620
    %v1622 = vlaneseq
    %v1623 = vshrl.u32 %v1622, 7
    %v1624 = vsub.s32 %v1621, %v1623
    %v1625 = vrot.slane %v1611, %v1624
    %v1628 = vunpack.c.l.s4 1966171168
    %v1629 = vunpack.c.0.s8 %v1628
    %v1630 = vlaneseq
    %v1631 = vshrl.u32 %v1630, 7
    %v1632 = vsub.s32 %v1629, %v1631
    %v1633 = vrot.slane %v1190, %v1632
    %v1634 = vcombine.high %v1633, %v1633
    %v1636 = vunpack.c.l.s4 1966171168
    %v1637 = vunpack.c.0.s8 %v1636
    %v1638 = vlaneseq
    %v1639 = vshrl.u32 %v1638, 7
    %v1640 = vsub.s32 %v1637, %v1639
    %v1641 = vrot.slane %v1633, %v1640
    %v1643 = vunpack.c.l.s4 1966171168
    %v1644 = vunpack.c.0.s8 %v1643
    %v1645 = vlaneseq
    %v1646 = vshrl.u32 %v1645, 7
    %v1647 = vsub.s32 %v1644, %v1646
    %v1648 = vrot.slane %v1634, %v1647
    %v1651 = vunpack.c.l.s4 1966171168
    %v1652 = vunpack.c.0.s8 %v1651
    %v1653 = vlaneseq
    %v1654 = vshrl.u32 %v1653, 7
    %v1655 = vsub.s32 %v1652, %v1654
    %v1656 = vrot.slane %v1345, %v1655
    %v1657 = vcombine.high %v1656, %v1656
    %v1659 = vunpack.c.l.s4 1966171168
    %v1660 = vunpack.c.0.s8 %v1659
    %v1661 = vlaneseq
    %v1662 = vshrl.u32 %v1661, 7
    %v1663 = vsub.s32 %v1660, %v1662
    %v1664 = vrot.slane %v1656, %v1663
    %v1666 = vunpack.c.l.s4 1966171168
    %v1667 = vunpack.c.0.s8 %v1666
    %v1668 = vlaneseq
    %v1669 = vshrl.u32 %v1668, 7
    %v1670 = vsub.s32 %v1667, %v1669
    %v1671 = vrot.slane %v1657, %v1670
    %v1674 = vunpack.c.l.s4 1966171168
    %v1675 = vunpack.c.0.s8 %v1674
    %v1676 = vlaneseq
    %v1677 = vshrl.u32 %v1676, 7
    %v1678 = vsub.s32 %v1675, %v1677
    %v1679 = vrot.slane %v1500, %v1678
    %v1680 = vcombine.high %v1679, %v1679
    %v1682 = vunpack.c.l.s4 1966171168
    %v1683 = vunpack.c.0.s8 %v1682
    %v1684 = vlaneseq
    %v1685 = vshrl.u32 %v1684, 7
    %v1686 = vsub.s32 %v1683, %v1685
    %v1687 = vrot.slane %v1679, %v1686
    %v1689 = vunpack.c.l.s4 1966171168
    %v1690 = vunpack.c.0.s8 %v1689
    %v1691 = vlaneseq
    %v1692 = vshrl.u32 %v1691, 7
    %v1693 = vsub.s32 %v1690, %v1692
    %v1694 = vrot.slane %v1680, %v1693
    %v1695 = vlaneseq
    %v1696 = vshrl.u32 %v1695, 7
    %v1697 = vsub.s32 0, %v1696
    %v1698 = vrot.slane %v1549, %v1697
    %v1699 = vlaneseq
    %v1700 = vshrl.u32 %v1699, 7
    %v1701 = vsub.s32 0, %v1700
    %v1702 = vrot.slane %v1556, %v1701
    %v1705 = vlaneseq
    %v1706 = vshrl.u32 %v1705, 7
    %v1707 = vsub.s32 0, %v1706
    %v1708 = vrot.slane %v1572, %v1707
    %v1709 = vlaneseq
    %v1710 = vshrl.u32 %v1709, 7
    %v1711 = vsub.s32 0, %v1710
    %v1712 = vrot.slane %v1579, %v1711
    %v1715 = vlaneseq
    %v1716 = vshrl.u32 %v1715, 7
    %v1717 = vsub.s32 0, %v1716
    %v1718 = vrot.slane %v1595, %v1717
    %v1719 = vlaneseq
    %v1720 = vshrl.u32 %v1719, 7
    %v1721 = vsub.s32 0, %v1720
    %v1722 = vrot.slane %v1602, %v1721
    %v1725 = vlaneseq
    %v1726 = vshrl.u32 %v1725, 7
    %v1727 = vsub.s32 0, %v1726
    %v1728 = vrot.slane %v1618, %v1727
    %v1729 = vlaneseq
    %v1730 = vshrl.u32 %v1729, 7
    %v1731 = vsub.s32 0, %v1730
    %v1732 = vrot.slane %v1625, %v1731
    %v1735 = vlaneseq
    %v1736 = vshrl.u32 %v1735, 7
    %v1737 = vsub.s32 0, %v1736
    %v1738 = vrot.slane %v1641, %v1737
    %v1739 = vlaneseq
    %v1740 = vshrl.u32 %v1739, 7
    %v1741 = vsub.s32 0, %v1740
    %v1742 = vrot.slane %v1648, %v1741
    %v1745 = vlaneseq
    %v1746 = vshrl.u32 %v1745, 7
    %v1747 = vsub.s32 0, %v1746
    %v1748 = vrot.slane %v1664, %v1747
    %v1749 = vlaneseq
    %v1750 = vshrl.u32 %v1749, 7
    %v1751 = vsub.s32 0, %v1750
    %v1752 = vrot.slane %v1671, %v1751
    %v1755 = vlaneseq
    %v1756 = vshrl.u32 %v1755, 7
    %v1757 = vsub.s32 0, %v1756
    %v1758 = vrot.slane %v1687, %v1757
    %v1759 = vlaneseq
    %v1760 = vshrl.u32 %v1759, 7
    %v1761 = vsub.s32 0, %v1760
    %v1762 = vrot.slane %v1694, %v1761
    %vm1765 = vcmask 1040384
    %v1766 = vsel %vm1765, %v1524, %v1698
    %v1767 = vsel %vm1765, %v1531, %v1702
    %vm1768 = vcmask 1041408
    %v1769 = vsel %vm1768, %v1766, %v1708
    %v1770 = vsel %vm1768, %v1767, %v1712
    %vm1771 = vcmask 1042432
    %v1772 = vsel %vm1771, %v1769, %v1718
    %v1773 = vsel %vm1771, %v1770, %v1722
    %v1774 = vsel %vm82, %v1772, %v1728
    %v1775 = vsel %vm82, %v1773, %v1732
    %vm1776 = vcmask 1044480
    %v1777 = vsel %vm1776, %v1774, %v1738
    %v1778 = vsel %vm1776, %v1775, %v1742
    %vm1779 = vcmask 1045504
    %v1780 = vsel %vm1779, %v1777, %v1748
    %v1781 = vsel %vm1779, %v1778, %v1752
    %vm1782 = vcmask 1046528
    %v1783 = vsel %vm1782, %v1780, %v1758
    %v1784 = vsel %vm1782, %v1781, %v1762
    %1785 = vst.msk [vmem:[#allocation2] sm:$0xff] %vm174, %v1783
    %1786 = vst.msk [vmem:[#allocation2 + $0x8] sm:$0xff] %vm174, %v1784
    %v1787 = vld [vmem:[%s10] sm:$0xff]
    %v1788 = vld [vmem:[%s10 + $0x8] sm:$0xff]
    %v1789 = vld [vmem:[%s10 + $0x10] sm:$0xff]
    %v1790 = vld [vmem:[%s10 + $0x18] sm:$0xff]
    %v1791 = vld [vmem:[%s11] sm:$0x1]
    %v1793 = vlaneseq
    %v1794 = vshrl.u32 %v1793, 7
    %v1795 = vsub.s32 0, %v1794
    %v1796 = vrot.slane %v1791, %v1795
    %v1799 = vsel %vm174, %v1783, 0
    %v1802 = vsel %vm174, %v1784, 0
    %1804 = vmatprep.subr.mxu0 0.0
    %1805 = vmatpush1.msra.mxu0 %v1787
    %1806 = vmatprep.subr.mxu0 0.0
    %1807 = vmatpush1.msra.mxu0 %v1788
    %1808 = vmatprep.subr.mxu0 0.0
    %1809 = vmatpush1.msra.mxu0 %v1789
    %1810 = vmatprep.subr.mxu0 0.0
    %1811 = vmatpush1.msra.mxu0 %v1790
    %1812 = vmatprep.subr.mxu0 0.0
    %1813 = vmatpush1.msra.mxu0 0.0
    %1814 = vmatprep.subr.mxu0 0.0
    %1815 = vmatpush1.msra.mxu0 0.0
    %1816 = vmatprep.subr.mxu0 0.0
    %1817 = vmatpush1.msra.mxu0 0.0
    %1818 = vmatprep.subr.mxu0 0.0
    %1819 = vmatpush1.msra.mxu0 0.0
    %1820 = vmatprep.subr.mxu0 0.0
    %1821 = vmatpush1.msra.mxu0 0.0
    %1822 = vmatprep.subr.mxu0 0.0
    %1823 = vmatpush1.msra.mxu0 0.0
    %1824 = vmatprep.subr.mxu0 0.0
    %1825 = vmatpush1.msra.mxu0 0.0
    %1826 = vmatprep.subr.mxu0 0.0
    %1827 = vmatpush1.msra.mxu0 0.0
    %1828 = vmatprep.subr.mxu0 0.0
    %1829 = vmatpush1.msra.mxu0 0.0
    %1830 = vmatprep.subr.mxu0 0.0
    %1831 = vmatpush1.msra.mxu0 0.0
    %1832 = vmatprep.subr.mxu0 0.0
    %1833 = vmatpush1.msra.mxu0 0.0
    %1834 = vmatprep.subr.mxu0 0.0
    %1835 = vmatpush1.msra.mxu0 0.0
    %1836 = vmatprep.subr.mxu0 0.0
    %1837 = vmatpush1.msra.mxu0 0.0
    %1838 = vmatprep.subr.mxu0 0.0
    %1839 = vmatpush1.msra.mxu0 0.0
    %1840 = vmatprep.subr.mxu0 0.0
    %1841 = vmatpush1.msra.mxu0 0.0
    %1842 = vmatprep.subr.mxu0 0.0
    %1843 = vmatpush1.msra.mxu0 0.0
    %1844 = vmatprep.subr.mxu0 0.0
    %1845 = vmatpush1.msra.mxu0 0.0
    %1846 = vmatprep.subr.mxu0 0.0
    %1847 = vmatpush1.msra.mxu0 0.0
    %1848 = vmatprep.subr.mxu0 0.0
    %1849 = vmatpush1.msra.mxu0 0.0
    %1850 = vmatprep.subr.mxu0 0.0
    %1851 = vmatpush1.msra.mxu0 0.0
    %1852 = vmatprep.subr.mxu0 0.0
    %1853 = vmatpush1.msra.mxu0 0.0
    %1854 = vmatprep.subr.mxu0 0.0
    %1855 = vmatpush1.msra.mxu0 0.0
    %1856 = vmatprep.subr.mxu0 0.0
    %1857 = vmatpush1.msra.mxu0 0.0
    %1858 = vmatprep.subr.mxu0 0.0
    %1859 = vmatpush1.msra.mxu0 0.0
    %1860 = vmatprep.subr.mxu0 0.0
    %1861 = vmatpush1.msra.mxu0 0.0
    %1862 = vmatprep.subr.mxu0 0.0
    %1863 = vmatpush1.msra.mxu0 0.0
    %1864 = vmatprep.subr.mxu0 0.0
    %1865 = vmatpush1.msra.mxu0 0.0
    %1866 = vmatprep.subr.mxu0 0.0
    %1867 = vmatpush1.msra.mxu0 0.0
    %1868 = vmatprep.mubr.f32.mxu0 0.0
    %1869 = vmatmul.mubr.f32.gmra.mrb[0].mxu0 %v1799
    %v1870 = vpop.f32.mrb[0].mxu0
    %v1871 = vadd.f32 %v1796, %v1870
    %v1872 = vpop.f32.mrb[0].mxu0
    %1873 = vmatprep.mubr.f32.mxu0 0.0
    %1874 = vmatmul.mubr.f32.gmra.mrb[0].mxu0 %v1802
    %v1875 = vpop.f32.mrb[0].mxu0
    %v1876 = vadd.f32 %v1796, %v1875
    %v1877 = vpop.f32.mrb[0].mxu0
    %1878 = vdwg.mxu0
    %v1879 = vmax.f32 %v1871, 0.0
    %v1880 = vmax.f32 %v1876, 0.0
    %v1881 = vld [vmem:[%s12] sm:$0xff]
    %v1882 = vld [vmem:[%s12 + $0x8] sm:$0xff]
    %v1883 = vld [vmem:[%s12 + $0x10] sm:$0xff]
    %v1884 = vld [vmem:[%s12 + $0x18] sm:$0xff]
    %v1885 = vld [vmem:[%s13] sm:$0x1]
    %v1887 = vlaneseq
    %v1888 = vshrl.u32 %v1887, 7
    %v1889 = vsub.s32 0, %v1888
    %v1890 = vrot.slane %v1885, %v1889
    %v1893 = vsel %vm174, %v1879, 0
    %v1896 = vsel %vm174, %v1880, 0
    %1898 = vmatprep.subr.mxu0 0.0
    %1899 = vmatpush1.msra.mxu0 %v1881
    %1900 = vmatprep.subr.mxu0 0.0
    %1901 = vmatpush1.msra.mxu0 %v1882
    %1902 = vmatprep.subr.mxu0 0.0
    %1903 = vmatpush1.msra.mxu0 %v1883
    %1904 = vmatprep.subr.mxu0 0.0
    %1905 = vmatpush1.msra.mxu0 %v1884
    %1906 = vmatprep.subr.mxu0 0.0
    %1907 = vmatpush1.msra.mxu0 0.0
    %1908 = vmatprep.subr.mxu0 0.0
    %1909 = vmatpush1.msra.mxu0 0.0
    %1910 = vmatprep.subr.mxu0 0.0
    %1911 = vmatpush1.msra.mxu0 0.0
    %1912 = vmatprep.subr.mxu0 0.0
    %1913 = vmatpush1.msra.mxu0 0.0
    %1914 = vmatprep.subr.mxu0 0.0
    %1915 = vmatpush1.msra.mxu0 0.0
    %1916 = vmatprep.subr.mxu0 0.0
    %1917 = vmatpush1.msra.mxu0 0.0
    %1918 = vmatprep.subr.mxu0 0.0
    %1919 = vmatpush1.msra.mxu0 0.0
    %1920 = vmatprep.subr.mxu0 0.0
    %1921 = vmatpush1.msra.mxu0 0.0
    %1922 = vmatprep.subr.mxu0 0.0
    %1923 = vmatpush1.msra.mxu0 0.0
    %1924 = vmatprep.subr.mxu0 0.0
    %1925 = vmatpush1.msra.mxu0 0.0
    %1926 = vmatprep.subr.mxu0 0.0
    %1927 = vmatpush1.msra.mxu0 0.0
    %1928 = vmatprep.subr.mxu0 0.0
    %1929 = vmatpush1.msra.mxu0 0.0
    %1930 = vmatprep.subr.mxu0 0.0
    %1931 = vmatpush1.msra.mxu0 0.0
    %1932 = vmatprep.subr.mxu0 0.0
    %1933 = vmatpush1.msra.mxu0 0.0
    %1934 = vmatprep.subr.mxu0 0.0
    %1935 = vmatpush1.msra.mxu0 0.0
    %1936 = vmatprep.subr.mxu0 0.0
    %1937 = vmatpush1.msra.mxu0 0.0
    %1938 = vmatprep.subr.mxu0 0.0
    %1939 = vmatpush1.msra.mxu0 0.0
    %1940 = vmatprep.subr.mxu0 0.0
    %1941 = vmatpush1.msra.mxu0 0.0
    %1942 = vmatprep.subr.mxu0 0.0
    %1943 = vmatpush1.msra.mxu0 0.0
    %1944 = vmatprep.subr.mxu0 0.0
    %1945 = vmatpush1.msra.mxu0 0.0
    %1946 = vmatprep.subr.mxu0 0.0
    %1947 = vmatpush1.msra.mxu0 0.0
    %1948 = vmatprep.subr.mxu0 0.0
    %1949 = vmatpush1.msra.mxu0 0.0
    %1950 = vmatprep.subr.mxu0 0.0
    %1951 = vmatpush1.msra.mxu0 0.0
    %1952 = vmatprep.subr.mxu0 0.0
    %1953 = vmatpush1.msra.mxu0 0.0
    %1954 = vmatprep.subr.mxu0 0.0
    %1955 = vmatpush1.msra.mxu0 0.0
    %1956 = vmatprep.subr.mxu0 0.0
    %1957 = vmatpush1.msra.mxu0 0.0
    %1958 = vmatprep.subr.mxu0 0.0
    %1959 = vmatpush1.msra.mxu0 0.0
    %1960 = vmatprep.subr.mxu0 0.0
    %1961 = vmatpush1.msra.mxu0 0.0
    %1962 = vmatprep.mubr.f32.mxu0 0.0
    %1963 = vmatmul.mubr.f32.gmra.mrb[0].mxu0 %v1893
    %v1964 = vpop.f32.mrb[0].mxu0
    %v1965 = vadd.f32 %v1890, %v1964
    %v1966 = vpop.f32.mrb[0].mxu0
    %1967 = vmatprep.mubr.f32.mxu0 0.0
    %1968 = vmatmul.mubr.f32.gmra.mrb[0].mxu0 %v1896
    %v1969 = vpop.f32.mrb[0].mxu0
    %v1970 = vadd.f32 %v1890, %v1969
    %v1971 = vpop.f32.mrb[0].mxu0
    %1972 = vdwg.mxu0
    %v1973 = vld [vmem:[%s1] sm:$0xff]
    %v1974 = vld [vmem:[%s1 + $0x8] sm:$0xff]
    %1977 = vrot.lane.b32.xlu0 %v1973, 32
    %v1978 = vpop.permute.xlu0 %1977
    %1979 = vrot.lane.b32.xlu0 %v1974, 32
    %v1980 = vpop.permute.xlu0 %1979
    %v1983 = vsel %vm174, %v1783, %v1978
    %v1984 = vsel %vm174, %v1784, %v1980
    %v1985 = vld [vmem:[%s14] sm:$0xff]
    %v1986 = vld [vmem:[%s14 + $0x8] sm:$0xff]
    %v1987 = vld [vmem:[%s14 + $0x10] sm:$0xff]
    %v1988 = vld [vmem:[%s14 + $0x18] sm:$0xff]
    %v1989 = vld [vmem:[%s14 + $0x20] sm:$0xff]
    %v1990 = vld [vmem:[%s14 + $0x28] sm:$0xff]
    %v1991 = vld [vmem:[%s14 + $0x30] sm:$0xff]
    %v1992 = vld [vmem:[%s14 + $0x38] sm:$0xff]
    %v1993 = vld [vmem:[%s14 + $0x40] sm:$0xff]
    %v1994 = vld [vmem:[%s14 + $0x48] sm:$0xff]
    %v1995 = vld [vmem:[%s14 + $0x50] sm:$0xff]
    %v1996 = vld [vmem:[%s14 + $0x58] sm:$0xff]
    %v1997 = vld [vmem:[%s15] sm:$0x1]
    %v1999 = vlaneseq
    %v2000 = vshrl.u32 %v1999, 7
    %v2001 = vsub.s32 0, %v2000
    %v2002 = vrot.slane %v1997, %v2001
    %vm2004 = vcmask 785408
    %v2006 = vsel %vm2004, %v1983, 0
    %v2009 = vsel %vm2004, %v1984, 0
    %2011 = vmatprep.subr.mxu0 0.0
    %2012 = vmatpush1.msra.mxu0 %v1985
    %2013 = vmatprep.subr.mxu0 0.0
    %2014 = vmatpush1.msra.mxu0 %v1986
    %2015 = vmatprep.subr.mxu0 0.0
    %2016 = vmatpush1.msra.mxu0 %v1987
    %2017 = vmatprep.subr.mxu0 0.0
    %2018 = vmatpush1.msra.mxu0 %v1988
    %2019 = vmatprep.subr.mxu0 0.0
    %2020 = vmatpush1.msra.mxu0 %v1989
    %2021 = vmatprep.subr.mxu0 0.0
    %2022 = vmatpush1.msra.mxu0 %v1990
    %2023 = vmatprep.subr.mxu0 0.0
    %2024 = vmatpush1.msra.mxu0 %v1991
    %2025 = vmatprep.subr.mxu0 0.0
    %2026 = vmatpush1.msra.mxu0 %v1992
    %2027 = vmatprep.subr.mxu0 0.0
    %2028 = vmatpush1.msra.mxu0 %v1993
    %2029 = vmatprep.subr.mxu0 0.0
    %2030 = vmatpush1.msra.mxu0 %v1994
    %2031 = vmatprep.subr.mxu0 0.0
    %2032 = vmatpush1.msra.mxu0 %v1995
    %2033 = vmatprep.subr.mxu0 0.0
    %2034 = vmatpush1.msra.mxu0 %v1996
    %2035 = vmatprep.subr.mxu0 0.0
    %2036 = vmatpush1.msra.mxu0 0.0
    %2037 = vmatprep.subr.mxu0 0.0
    %2038 = vmatpush1.msra.mxu0 0.0
    %2039 = vmatprep.subr.mxu0 0.0
    %2040 = vmatpush1.msra.mxu0 0.0
    %2041 = vmatprep.subr.mxu0 0.0
    %2042 = vmatpush1.msra.mxu0 0.0
    %2043 = vmatprep.subr.mxu0 0.0
    %2044 = vmatpush1.msra.mxu0 0.0
    %2045 = vmatprep.subr.mxu0 0.0
    %2046 = vmatpush1.msra.mxu0 0.0
    %2047 = vmatprep.subr.mxu0 0.0
    %2048 = vmatpush1.msra.mxu0 0.0
    %2049 = vmatprep.subr.mxu0 0.0
    %2050 = vmatpush1.msra.mxu0 0.0
    %2051 = vmatprep.subr.mxu0 0.0
    %2052 = vmatpush1.msra.mxu0 0.0
    %2053 = vmatprep.subr.mxu0 0.0
    %2054 = vmatpush1.msra.mxu0 0.0
    %2055 = vmatprep.subr.mxu0 0.0
    %2056 = vmatpush1.msra.mxu0 0.0
    %2057 = vmatprep.subr.mxu0 0.0
    %2058 = vmatpush1.msra.mxu0 0.0
    %2059 = vmatprep.subr.mxu0 0.0
    %2060 = vmatpush1.msra.mxu0 0.0
    %2061 = vmatprep.subr.mxu0 0.0
    %2062 = vmatpush1.msra.mxu0 0.0
    %2063 = vmatprep.subr.mxu0 0.0
    %2064 = vmatpush1.msra.mxu0 0.0
    %2065 = vmatprep.subr.mxu0 0.0
    %2066 = vmatpush1.msra.mxu0 0.0
    %2067 = vmatprep.subr.mxu0 0.0
    %2068 = vmatpush1.msra.mxu0 0.0
    %2069 = vmatprep.subr.mxu0 0.0
    %2070 = vmatpush1.msra.mxu0 0.0
    %2071 = vmatprep.subr.mxu0 0.0
    %2072 = vmatpush1.msra.mxu0 0.0
    %2073 = vmatprep.subr.mxu0 0.0
    %2074 = vmatpush1.msra.mxu0 0.0
    %2075 = vmatprep.mubr.f32.mxu0 0.0
    %2076 = vmatmul.mubr.f32.gmra.mrb[0].mxu0 %v2006
    %v2077 = vpop.f32.mrb[0].mxu0
    %v2078 = vadd.f32 %v2002, %v2077
    %v2079 = vpop.f32.mrb[0].mxu0
    %2080 = vmatprep.mubr.f32.mxu0 0.0
    %2081 = vmatmul.mubr.f32.gmra.mrb[0].mxu0 %v2009
    %v2082 = vpop.f32.mrb[0].mxu0
    %v2083 = vadd.f32 %v2002, %v2082
    %v2084 = vpop.f32.mrb[0].mxu0
    %2085 = vdwg.mxu0
    %v2086 = vmax.f32 %v2078, 0.0
    %v2087 = vmax.f32 %v2083, 0.0
    %v2088 = vld [vmem:[%s16] sm:$0xff]
    %v2089 = vld [vmem:[%s16 + $0x8] sm:$0xff]
    %v2090 = vld [vmem:[%s16 + $0x10] sm:$0xff]
    %v2091 = vld [vmem:[%s16 + $0x18] sm:$0xff]
    %v2092 = vld [vmem:[%s17] sm:$0x1]
    %v2094 = vlaneseq
    %v2095 = vshrl.u32 %v2094, 7
    %v2096 = vsub.s32 0, %v2095
    %v2097 = vrot.slane %v2092, %v2096
    %v2100 = vsel %vm174, %v2086, 0
    %v2103 = vsel %vm174, %v2087, 0
    %2105 = vmatprep.subr.mxu0 0.0
    %2106 = vmatpush1.msra.mxu0 %v2088
    %2107 = vmatprep.subr.mxu0 0.0
    %2108 = vmatpush1.msra.mxu0 %v2089
    %2109 = vmatprep.subr.mxu0 0.0
    %2110 = vmatpush1.msra.mxu0 %v2090
    %2111 = vmatprep.subr.mxu0 0.0
    %2112 = vmatpush1.msra.mxu0 %v2091
    %2113 = vmatprep.subr.mxu0 0.0
    %2114 = vmatpush1.msra.mxu0 0.0
    %2115 = vmatprep.subr.mxu0 0.0
    %2116 = vmatpush1.msra.mxu0 0.0
    %2117 = vmatprep.subr.mxu0 0.0
    %2118 = vmatpush1.msra.mxu0 0.0
    %2119 = vmatprep.subr.mxu0 0.0
    %2120 = vmatpush1.msra.mxu0 0.0
    %2121 = vmatprep.subr.mxu0 0.0
    %2122 = vmatpush1.msra.mxu0 0.0
    %2123 = vmatprep.subr.mxu0 0.0
    %2124 = vmatpush1.msra.mxu0 0.0
    %2125 = vmatprep.subr.mxu0 0.0
    %2126 = vmatpush1.msra.mxu0 0.0
    %2127 = vmatprep.subr.mxu0 0.0
    %2128 = vmatpush1.msra.mxu0 0.0
    %2129 = vmatprep.subr.mxu0 0.0
    %2130 = vmatpush1.msra.mxu0 0.0
    %2131 = vmatprep.subr.mxu0 0.0
    %2132 = vmatpush1.msra.mxu0 0.0
    %2133 = vmatprep.subr.mxu0 0.0
    %2134 = vmatpush1.msra.mxu0 0.0
    %2135 = vmatprep.subr.mxu0 0.0
    %2136 = vmatpush1.msra.mxu0 0.0
    %2137 = vmatprep.subr.mxu0 0.0
    %2138 = vmatpush1.msra.mxu0 0.0
    %2139 = vmatprep.subr.mxu0 0.0
    %2140 = vmatpush1.msra.mxu0 0.0
    %2141 = vmatprep.subr.mxu0 0.0
    %2142 = vmatpush1.msra.mxu0 0.0
    %2143 = vmatprep.subr.mxu0 0.0
    %2144 = vmatpush1.msra.mxu0 0.0
    %2145 = vmatprep.subr.mxu0 0.0
    %2146 = vmatpush1.msra.mxu0 0.0
    %2147 = vmatprep.subr.mxu0 0.0
    %2148 = vmatpush1.msra.mxu0 0.0
    %2149 = vmatprep.subr.mxu0 0.0
    %2150 = vmatpush1.msra.mxu0 0.0
    %2151 = vmatprep.subr.mxu0 0.0
    %2152 = vmatpush1.msra.mxu0 0.0
    %2153 = vmatprep.subr.mxu0 0.0
    %2154 = vmatpush1.msra.mxu0 0.0
    %2155 = vmatprep.subr.mxu0 0.0
    %2156 = vmatpush1.msra.mxu0 0.0
    %2157 = vmatprep.subr.mxu0 0.0
    %2158 = vmatpush1.msra.mxu0 0.0
    %2159 = vmatprep.subr.mxu0 0.0
    %2160 = vmatpush1.msra.mxu0 0.0
    %2161 = vmatprep.subr.mxu0 0.0
    %2162 = vmatpush1.msra.mxu0 0.0
    %2163 = vmatprep.subr.mxu0 0.0
    %2164 = vmatpush1.msra.mxu0 0.0
    %2165 = vmatprep.subr.mxu0 0.0
    %2166 = vmatpush1.msra.mxu0 0.0
    %2167 = vmatprep.subr.mxu0 0.0
    %2168 = vmatpush1.msra.mxu0 0.0
    %2169 = vmatprep.mubr.f32.mxu0 0.0
    %2170 = vmatmul.mubr.f32.gmra.mrb[0].mxu0 %v2100
    %v2171 = vpop.f32.mrb[0].mxu0
    %v2172 = vadd.f32 %v2097, %v2171
    %v2173 = vpop.f32.mrb[0].mxu0
    %2174 = vmatprep.mubr.f32.mxu0 0.0
    %2175 = vmatmul.mubr.f32.gmra.mrb[0].mxu0 %v2103
    %v2176 = vpop.f32.mrb[0].mxu0
    %v2177 = vadd.f32 %v2097, %v2176
    %v2178 = vpop.f32.mrb[0].mxu0
    %2179 = vdwg.mxu0
    %2182 = vrot.lane.b32.xlu0 %v2172, 16
    %v2183 = vpop.permute.xlu0 %2182
    %2184 = vrot.lane.b32.xlu0 %v2177, 16
    %v2185 = vpop.permute.xlu0 %2184
    %vm2188 = vcmask 130048
    %v2189 = vsel %vm2188, %v1965, %v2183
    %v2190 = vsel %vm2188, %v1970, %v2185
    %v2191 = vlaneseq
    %v2192 = vand.u32 %v2191, 127
    %vm2193 = vcmp.ge.s32.totalorder %v2192, 8
    %vm2194 = vcmp.lt.s32.totalorder %v2192, 16
    %vm2195 = vmand %vm2193, %vm2194
    %vm2196 = vcmp.ge.s32.totalorder %v2192, 24
    %vm2197 = vmor %vm2195, %vm2196
    %v2198 = vmax.f32 %v2189, 0.0
    %v2199 = vmax.f32 %v2190, 0.0
    %vm2200 = vcmp.ne.f32.partialorder %v2189, %v2189
    %vm2201 = vcmp.ne.f32.partialorder %v2190, %v2190
    %v2202 = vadd.f32 %v2189, 0.0
    %v2203 = vadd.f32 %v2190, 0.0
    %v2204 = vand.u32 2147483647, %v2189
    %v2205 = vand.u32 2147483647, %v2190
    %v2206 = vsub.f32 0.0, %v2204
    %v2207 = vsub.f32 0.0, %v2205
    %v2208 = vmul.f32 %v2206, 1.442695
    %v2209 = vpow.pop %v2208
    %v2210 = vmul.f32 %v2207, 1.442695
    %v2211 = vpow.pop %v2210
    %v2212 = vadd.f32 %v2209, 1.0
    %v2213 = vlog2.pop %v2212
    %v2214 = vmul.f32 %v2213, 0.6931472
    %v2215 = vmul.f32 -0.5, %v2209
    %v2216 = vadd.f32 %v2215, 1.0
    %v2217 = vmul.f32 %v2216, %v2209
    %v2218 = vand.u32 2147483647, %v2209
    %vm2219 = vcmp.lt.f32.partialorder %v2218, 0.0004427343
    %v2220 = vsel %vm2219, %v2217, %v2214
    %v2221 = vadd.f32 %v2211, 1.0
    %v2222 = vlog2.pop %v2221
    %v2223 = vmul.f32 %v2222, 0.6931472
    %v2224 = vmul.f32 -0.5, %v2211
    %v2225 = vadd.f32 %v2224, 1.0
    %v2226 = vmul.f32 %v2225, %v2211
    %v2227 = vand.u32 2147483647, %v2211
    %vm2228 = vcmp.lt.f32.partialorder %v2227, 0.0004427343
    %v2229 = vsel %vm2228, %v2226, %v2223
    %v2230 = vadd.f32 %v2198, %v2220
    %v2231 = vadd.f32 %v2199, %v2229
    %v2232 = vsel %vm2200, %v2202, %v2230
    %v2233 = vsel %vm2201, %v2203, %v2231
    %v2234 = vadd.f32 %v2232, 0.1
    %v2235 = vadd.f32 %v2233, 0.1
    %v2236 = vsel %vm2197, %v2234, %v2189
    %v2237 = vsel %vm2197, %v2235, %v2190
    %2238 = vst.msk [vmem:[%s20] sm:$0xff] %vm174, %v2236
    %2239 = vst.msk [vmem:[%s20 + $0x8] sm:$0xff] %vm174, %v2237
    // Predicated region
    $region74: #{rssm_forward.1} parent=1 // pred_check
      _
    $region75: #{rssm_forward.1} parent=1 // pred_check_branch
      %2241 = sbr.rel (0) target = $region77
    $region76: #{rssm_forward.1} parent=1 // pred_region
      %s2243 = ssub.s32 256, 256
      %2244 = vsyncadd [#allocation3], %s2243
      %s2245 = sshll.u32 [#allocation2], 4
      %s2246 = int_to_ptr.vmem [resolvable:$true] %s2245
      %2251 = dma.vmem_to_hbm [thread:$0]  %s2246, 256, %s18, [#allocation3], 128, 128, 8
    $region77: #{rssm_forward.1} parent=1 // pred_fallthru
      _
    // Predicated region
    $region78: #{rssm_forward.1} parent=1 // pred_check
      _
    $region79: #{rssm_forward.1} parent=1 // pred_check_branch
      %2253 = sbr.rel (0) target = $region81
    $region80: #{rssm_forward.1} parent=1 // pred_region
      %s2255 = ssub.s32 32, 32
      %2256 = vsyncadd [#allocation5], %s2255
      %s2258 = sshll.u32 [#allocation4], 4
      %s2259 = int_to_ptr.vmem [resolvable:$true] %s2258
      %2261 = dma.vmem_to_hbm [thread:$0]  %s2259, 32, %s19, [#allocation5]
    $region81: #{rssm_forward.1} parent=1 // pred_fallthru
      _
    // Predicated region
    $region82: #{rssm_forward.1} parent=1 // pred_check
      _
    $region83: #{rssm_forward.1} parent=1 // pred_check_branch
      %2263 = sbr.rel (0) target = $region85
    $region84: #{rssm_forward.1} parent=1 // pred_region
      _
    $region85: #{rssm_forward.1} parent=1 // pred_fallthru
      _
    // Predicated region
    $region86: #{rssm_forward.1} parent=1 // pred_check
      _
    $region87: #{rssm_forward.1} parent=1 // pred_check_branch
      %2265 = sbr.rel (0) target = $region89
    $region88: #{rssm_forward.1} parent=1 // pred_region
      %2266 = dma.done [#allocation3], 256
    $region89: #{rssm_forward.1} parent=1 // pred_fallthru
      _
    // Predicated region
    $region90: #{rssm_forward.1} parent=1 // pred_check
      _
    $region91: #{rssm_forward.1} parent=1 // pred_check_branch
      %2268 = sbr.rel (0) target = $region93
    $region92: #{rssm_forward.1} parent=1 // pred_region
      %2269 = dma.done [#allocation5], 32
    $region93: #{rssm_forward.1} parent=1 // pred_fallthru
      _
    // Predicated region
    $region94: #{rssm_forward.1} parent=1 // pred_check
      _
    $region95: #{rssm_forward.1} parent=1 // pred_check_branch
      %2271 = sbr.rel (0) target = $region97
    $region96: #{rssm_forward.1} parent=1 // pred_region
      _
    $region97: #{rssm_forward.1} parent=1 // pred_fallthru
      _
    %2272 = vsyncpa [#allocation3], 1
    %2273 = vsyncpa [#allocation5], 1

</llo_original>
